<compile_context>
chip_gen: v7x
topology: tpu7x:2x2x1
jax: 0.10.0
libtpu: 0.0.40
codegen_flags: <defaults>
</compile_context>

<pallas_src>
import functools

import jax
import jax.numpy as jnp
from jax.experimental import pallas as pl
from jax.experimental.pallas import tpu as pltpu


def _round_up(n, m):
    return ((n + m - 1) // m) * m


def _gelu(x, approximate):
    if approximate:
        # tanh approximation -> EUP slot (near-free once the MXU is busy).
        return jax.nn.gelu(x, approximate=True)
    # Exact erf-based GELU, matches nn.GELU() default.
    return 0.5 * x * (1.0 + jax.lax.erf(x * 0.7071067811865476))


def _ffn_kernel(x_ref, w1_ref, b1_ref, w2_ref, b2_ref, w3_ref, b3_ref,
                gamma_ref, beta_ref, o_ref, *,
                eps, d_out, residual, compute_dtype, approximate_gelu):
    cd = compute_dtype

    # Layer 1: Linear + GELU.
    h = jnp.dot(x_ref[...].astype(cd), w1_ref[...],
                preferred_element_type=jnp.float32)
    h = _gelu(h + b1_ref[...], approximate_gelu)

    # Layer 2: Linear + GELU.
    h = jnp.dot(h.astype(cd), w2_ref[...], preferred_element_type=jnp.float32)
    h = _gelu(h + b2_ref[...], approximate_gelu)

    # Layer 3: output projection.
    y = jnp.dot(h.astype(cd), w3_ref[...],
                preferred_element_type=jnp.float32) + b3_ref[...]

    if residual:
        # Re-read the VMEM-resident input tile here instead of keeping an f32
        # copy live across the three matmuls + two GELUs.
        y = y + x_ref[...].astype(jnp.float32)

    # LayerNorm over the true (unpadded) output features.  Padded lanes of y
    # are exactly zero (zero-padded weights / biases / residual), so tile-wide
    # sums divided by d_out give the correct statistics.
    d_pad = y.shape[-1]
    inv_d = 1.0 / float(d_out)
    mean = jnp.sum(y, axis=-1, keepdims=True) * inv_d
    if d_pad != d_out:
        lane = jax.lax.broadcasted_iota(jnp.int32, y.shape, 1)
        yc = jnp.where(lane < d_out, y - mean, 0.0)
    else:
        yc = y - mean
    var = jnp.sum(yc * yc, axis=-1, keepdims=True) * inv_d
    y_hat = yc * jax.lax.rsqrt(var + eps)
    o_ref[...] = (y_hat * gamma_ref[...] + beta_ref[...]).astype(o_ref.dtype)


def _default_vmem_limit():
    try:
        cap = pltpu.get_tpu_info().vmem_capacity_bytes
        return int(cap * 0.85)          # leave compiler headroom
    except Exception:
        return 64 * 1024 * 1024         # safe on v5e/v6e/v7x


def prepare_params(params, *, use_bf16_matmul=True):
    """Pad weights to lane-dense shapes and cast matmul operands once."""
    D, H = params["w1"].shape
    O = params["w3"].shape[1]
    Dp, Hp, Op = _round_up(D, 128), _round_up(H, 128), _round_up(O, 128)
    mxu_dtype = jnp.bfloat16 if use_bf16_matmul else jnp.float32
    padded = dict(
        w1=jnp.pad(params["w1"], ((0, Dp - D), (0, Hp - H))).astype(mxu_dtype),
        b1=jnp.pad(params["b1"], ((0, 0), (0, Hp - H))),
        w2=jnp.pad(params["w2"], ((0, Hp - H), (0, Hp - H))).astype(mxu_dtype),
        b2=jnp.pad(params["b2"], ((0, 0), (0, Hp - H))),
        w3=jnp.pad(params["w3"], ((0, Hp - H), (0, Op - O))).astype(mxu_dtype),
        b3=jnp.pad(params["b3"], ((0, 0), (0, Op - O))),
        gamma=jnp.pad(params["gamma"], ((0, 0), (0, Op - O))),
        beta=jnp.pad(params["beta"], ((0, 0), (0, Op - O))),
    )
    meta = dict(D=D, H=H, O=O, Dp=Dp, Hp=Hp, Op=Op, mxu_dtype=mxu_dtype)
    return padded, meta


def improved_update_ffn(x, params, *, block_b=256, eps=1e-5,
                        use_bf16_matmul=True, approximate_gelu=False,
                        vmem_limit_bytes=None, weight_buffering=1):
    """x: (B, D) float32.  params: dict from init_params.  Returns (B, output_dim)."""
    B, D = x.shape
    pp, meta = prepare_params(params, use_bf16_matmul=use_bf16_matmul)
    assert meta["D"] == D, "x feature dim does not match params"
    H, O = meta["H"], meta["O"]
    Dp, Hp, Op = meta["Dp"], meta["Hp"], meta["Op"]
    # PyTorch module adds the residual only when input_dim == output_dim.
    residual = (O == D)

    # Batch tile: multiple of 8 (f32 sublane), capped at the padded batch so a
    # small B runs as a single grid step (no per-step pipeline overhead).
    block_b = max(8, min(_round_up(block_b, 8), _round_up(B, 8)))
    Bp = _round_up(B, block_b)

    x_p = jnp.pad(x, ((0, Bp - B), (0, Dp - D))) if (Bp != B or Dp != D) else x

    if vmem_limit_bytes is None:
        vmem_limit_bytes = _default_vmem_limit()

    kernel = functools.partial(
        _ffn_kernel, eps=eps, d_out=O, residual=residual,
        compute_dtype=meta["mxu_dtype"], approximate_gelu=approximate_gelu)

    bytes_el = 4
    cost = pl.CostEstimate(
        flops=2 * Bp * (Dp * Hp + Hp * Hp + Hp * Op),
        transcendentals=2 * Bp * Hp,
        bytes_accessed=bytes_el * (Bp * Dp + Bp * Op)
        + 2 * (Dp * Hp + Hp * Hp + Hp * Op) + bytes_el * 5 * Op,
    )

    def _call(wb):
        def invariant(shape):
            # Grid-invariant operands (block index constant across the grid):
            # optionally single-buffered to halve their VMEM footprint.
            kwargs = {}
            if wb is not None:
                kwargs["pipeline_mode"] = pl.Buffered(wb)
            return pl.BlockSpec(shape, lambda i: tuple(0 for _ in shape), **kwargs)

        return pl.pallas_call(
            kernel,
            out_shape=jax.ShapeDtypeStruct((Bp, Op), x.dtype),
            grid_spec=pltpu.PrefetchScalarGridSpec(
                num_scalar_prefetch=0,
                grid=(Bp // block_b,),
                in_specs=[
                    pl.BlockSpec((block_b, Dp), lambda i: (i, 0)),  # x tile
                    invariant((Dp, Hp)),   # w1
                    invariant((1, Hp)),    # b1
                    invariant((Hp, Hp)),   # w2
                    invariant((1, Hp)),    # b2
                    invariant((Hp, Op)),   # w3
                    invariant((1, Op)),    # b3
                    invariant((1, Op)),    # gamma
                    invariant((1, Op)),    # beta
                ],
                out_specs=pl.BlockSpec((block_b, Op), lambda i: (i, 0)),
            ),
            compiler_params=pltpu.CompilerParams(
                dimension_semantics=("parallel",),
                vmem_limit_bytes=vmem_limit_bytes),
            cost_estimate=cost,
        )(x_p, pp["w1"], pp["b1"], pp["w2"], pp["b2"], pp["w3"], pp["b3"],
          pp["gamma"], pp["beta"])

    try:
        out = _call(weight_buffering)
    except Exception:
        # Fallback if this jax version rejects single-buffered BlockSpecs.
        out = _call(None)

    return out[:B, :O]


def init_params(key, input_dim, hidden_dim, output_dim=None):
    """Deterministic synthetic init (uniform +-1/sqrt(fan_in), like nn.Linear)."""
    if output_dim is None:
        output_dim = input_dim
    k1, k2, k3, k4, k5, k6 = jax.random.split(key, 6)

    def lin(kw, kb, fan_in, fan_out):
        bound = 1.0 / jnp.sqrt(float(fan_in))
        w = jax.random.uniform(kw, (fan_in, fan_out), jnp.float32, -bound, bound)
        b = jax.random.uniform(kb, (1, fan_out), jnp.float32, -bound, bound)
        return w, b

    w1, b1 = lin(k1, k2, input_dim, hidden_dim)
    w2, b2 = lin(k3, k4, hidden_dim, hidden_dim)
    w3, b3 = lin(k5, k6, hidden_dim, output_dim)
    return dict(
        w1=w1, b1=b1, w2=w2, b2=b2, w3=w3, b3=b3,
        gamma=jnp.ones((1, output_dim), jnp.float32),   # nn.LayerNorm defaults
        beta=jnp.zeros((1, output_dim), jnp.float32),
    )


def reference(x, params, eps=1e-5):
    h = jax.nn.gelu(x @ params["w1"] + params["b1"], approximate=False)
    h = jax.nn.gelu(h @ params["w2"] + params["b2"], approximate=False)
    y = h @ params["w3"] + params["b3"]
    if params["w3"].shape[1] == x.shape[1]:
        y = y + x
    mean = jnp.mean(y, -1, keepdims=True)
    var = jnp.mean((y - mean) ** 2, -1, keepdims=True)
    return (y - mean) / jnp.sqrt(var + eps) * params["gamma"] + params["beta"]


if __name__ == "__main__":
    # Small shapes consistent with the module; B deliberately not a multiple of
    # the batch tile to exercise tail padding.
    B, D, H = 40, 32, 64
    key = jax.random.PRNGKey(0)
    kx, kp = jax.random.split(key)
    x = jax.random.normal(kx, (B, D), jnp.float32)
    params = init_params(kp, D, H)

    ref = reference(x, params)

    # f32 MXU path with a multi-step grid (exercises batch tiling + padding).
    out_f32 = jax.block_until_ready(
        improved_update_ffn(x, params, block_b=16, use_bf16_matmul=False))
    assert out_f32.shape == (B, D)
    assert jnp.allclose(out_f32, ref, atol=1e-4, rtol=1e-4)

    # Default fast path: bf16 MXU inputs, f32 accumulation / GELU / LayerNorm.
    out_bf16 = jax.block_until_ready(improved_update_ffn(x, params))
    assert out_bf16.shape == (B, D)
    assert jnp.allclose(out_bf16, ref, atol=5e-2, rtol=5e-2)

    print("KERNEL_OK")
</pallas_src>

<mosaic_0001>
module attributes {stable_mosaic.version = 11 : i64} {
  func.func @_ffn_kernel(%arg0: i32, %arg1: memref<16x128xf32, #tpu.memory_space<vmem>>, %arg2: memref<128x128xf32, #tpu.memory_space<vmem>>, %arg3: memref<1x128xf32, #tpu.memory_space<vmem>>, %arg4: memref<128x128xf32, #tpu.memory_space<vmem>>, %arg5: memref<1x128xf32, #tpu.memory_space<vmem>>, %arg6: memref<128x128xf32, #tpu.memory_space<vmem>>, %arg7: memref<1x128xf32, #tpu.memory_space<vmem>>, %arg8: memref<1x128xf32, #tpu.memory_space<vmem>>, %arg9: memref<1x128xf32, #tpu.memory_space<vmem>>, %arg10: memref<16x128xf32, #tpu.memory_space<vmem>>) attributes {dimension_semantics = [#tpu.dimension_semantics<parallel>], iteration_bounds = array<i64: 3>, scalar_prefetch = 0 : i64, scratch_operands = 0 : i64, tpu.core_type = #tpu.core_type<tc>, window_params = [{transform_indices = @transform_0, window_bounds = array<i64: 16, 128>}, {pipeline_mode = #tpu.pipeline_mode<synchronous>, transform_indices = @transform_1, window_bounds = array<i64: 128, 128>}, {pipeline_mode = #tpu.pipeline_mode<synchronous>, transform_indices = @transform_2, window_bounds = array<i64: 1, 128>}, {pipeline_mode = #tpu.pipeline_mode<synchronous>, transform_indices = @transform_3, window_bounds = array<i64: 128, 128>}, {pipeline_mode = #tpu.pipeline_mode<synchronous>, transform_indices = @transform_4, window_bounds = array<i64: 1, 128>}, {pipeline_mode = #tpu.pipeline_mode<synchronous>, transform_indices = @transform_5, window_bounds = array<i64: 128, 128>}, {pipeline_mode = #tpu.pipeline_mode<synchronous>, transform_indices = @transform_6, window_bounds = array<i64: 1, 128>}, {pipeline_mode = #tpu.pipeline_mode<synchronous>, transform_indices = @transform_7, window_bounds = array<i64: 1, 128>}, {pipeline_mode = #tpu.pipeline_mode<synchronous>, transform_indices = @transform_8, window_bounds = array<i64: 1, 128>}, {transform_indices = @transform_9, window_bounds = array<i64: 16, 128>}]} {
    %c0 = arith.constant 0 : index
    %c0_0 = arith.constant 0 : index
    %0 = vector.load %arg1[%c0, %c0_0] : memref<16x128xf32, #tpu.memory_space<vmem>>, vector<16x128xf32>
    %c0_1 = arith.constant 0 : index
    %c0_2 = arith.constant 0 : index
    %1 = vector.load %arg2[%c0_1, %c0_2] : memref<128x128xf32, #tpu.memory_space<vmem>>, vector<128x128xf32>
    %cst = arith.constant dense<0.000000e+00> : vector<16x128xf32>
    %2 = tpu.matmul %0, %1, %cst {dimension_numbers = #tpu.dot_dimension_numbers<[1], [0], [0], [1], [0, 0, 1, 1], [], []>} : vector<16x128xf32>, vector<128x128xf32>, vector<16x128xf32> -> vector<16x128xf32>
    %c0_3 = arith.constant 0 : index
    %c0_4 = arith.constant 0 : index
    %3 = vector.load %arg3[%c0_3, %c0_4] : memref<1x128xf32, #tpu.memory_space<vmem>>, vector<1x128xf32>
    %4 = vector.broadcast %3 : vector<1x128xf32> to vector<16x128xf32>
    %5 = arith.addf %2, %4 : vector<16x128xf32>
    %cst_5 = arith.constant 5.000000e-01 : f32
    %6 = vector.broadcast %cst_5 : f32 to vector<16x128xf32>
    %7 = arith.mulf %6, %5 : vector<16x128xf32>
    %cst_6 = arith.constant 0.707106769 : f32
    %8 = vector.broadcast %cst_6 : f32 to vector<16x128xf32>
    %9 = arith.mulf %5, %8 : vector<16x128xf32>
    %10 = math.erf %9 : vector<16x128xf32>
    %cst_7 = arith.constant 1.000000e+00 : f32
    %11 = vector.broadcast %cst_7 : f32 to vector<16x128xf32>
    %12 = arith.addf %11, %10 : vector<16x128xf32>
    %13 = arith.mulf %7, %12 : vector<16x128xf32>
    %c0_8 = arith.constant 0 : index
    %c0_9 = arith.constant 0 : index
    %14 = vector.load %arg4[%c0_8, %c0_9] : memref<128x128xf32, #tpu.memory_space<vmem>>, vector<128x128xf32>
    %cst_10 = arith.constant dense<0.000000e+00> : vector<16x128xf32>
    %15 = tpu.matmul %13, %14, %cst_10 {dimension_numbers = #tpu.dot_dimension_numbers<[1], [0], [0], [1], [0, 0, 1, 1], [], []>} : vector<16x128xf32>, vector<128x128xf32>, vector<16x128xf32> -> vector<16x128xf32>
    %c0_11 = arith.constant 0 : index
    %c0_12 = arith.constant 0 : index
    %16 = vector.load %arg5[%c0_11, %c0_12] : memref<1x128xf32, #tpu.memory_space<vmem>>, vector<1x128xf32>
    %17 = vector.broadcast %16 : vector<1x128xf32> to vector<16x128xf32>
    %18 = arith.addf %15, %17 : vector<16x128xf32>
    %cst_13 = arith.constant 5.000000e-01 : f32
    %19 = vector.broadcast %cst_13 : f32 to vector<16x128xf32>
    %20 = arith.mulf %19, %18 : vector<16x128xf32>
    %cst_14 = arith.constant 0.707106769 : f32
    %21 = vector.broadcast %cst_14 : f32 to vector<16x128xf32>
    %22 = arith.mulf %18, %21 : vector<16x128xf32>
    %23 = math.erf %22 : vector<16x128xf32>
    %cst_15 = arith.constant 1.000000e+00 : f32
    %24 = vector.broadcast %cst_15 : f32 to vector<16x128xf32>
    %25 = arith.addf %24, %23 : vector<16x128xf32>
    %26 = arith.mulf %20, %25 : vector<16x128xf32>
    %c0_16 = arith.constant 0 : index
    %c0_17 = arith.constant 0 : index
    %27 = vector.load %arg6[%c0_16, %c0_17] : memref<128x128xf32, #tpu.memory_space<vmem>>, vector<128x128xf32>
    %cst_18 = arith.constant dense<0.000000e+00> : vector<16x128xf32>
    %28 = tpu.matmul %26, %27, %cst_18 {dimension_numbers = #tpu.dot_dimension_numbers<[1], [0], [0], [1], [0, 0, 1, 1], [], []>} : vector<16x128xf32>, vector<128x128xf32>, vector<16x128xf32> -> vector<16x128xf32>
    %c0_19 = arith.constant 0 : index
    %c0_20 = arith.constant 0 : index
    %29 = vector.load %arg7[%c0_19, %c0_20] : memref<1x128xf32, #tpu.memory_space<vmem>>, vector<1x128xf32>
    %30 = vector.broadcast %29 : vector<1x128xf32> to vector<16x128xf32>
    %31 = arith.addf %28, %30 : vector<16x128xf32>
    %c0_21 = arith.constant 0 : index
    %c0_22 = arith.constant 0 : index
    %32 = vector.load %arg1[%c0_21, %c0_22] : memref<16x128xf32, #tpu.memory_space<vmem>>, vector<16x128xf32>
    %33 = arith.addf %31, %32 : vector<16x128xf32>
    %cst_23 = arith.constant dense<0.000000e+00> : vector<16xf32>
    %34 = vector.multi_reduction <add>, %33, %cst_23 [1] : vector<16x128xf32> to vector<16xf32>
    %35 = vector.shape_cast %34 : vector<16xf32> to vector<16x1xf32>
    %cst_24 = arith.constant 3.125000e-02 : f32
    %36 = vector.broadcast %cst_24 : f32 to vector<16x1xf32>
    %37 = arith.mulf %35, %36 : vector<16x1xf32>
    %38 = tpu.iota {dimensions = array<i32: 1>} : vector<16x128xi32>
    %c32_i32 = arith.constant 32 : i32
    %39 = vector.broadcast %c32_i32 : i32 to vector<16x128xi32>
    %40 = arith.cmpi slt, %38, %39 : vector<16x128xi32>
    %41 = vector.broadcast %37 : vector<16x1xf32> to vector<16x128xf32>
    %42 = arith.subf %33, %41 : vector<16x128xf32>
    %cst_25 = arith.constant 0.000000e+00 : f32
    %43 = vector.broadcast %cst_25 : f32 to vector<16x128xf32>
    %44 = arith.select %40, %42, %43 : vector<16x128xi1>, vector<16x128xf32>
    %45 = arith.mulf %44, %44 : vector<16x128xf32>
    %cst_26 = arith.constant dense<0.000000e+00> : vector<16xf32>
    %46 = vector.multi_reduction <add>, %45, %cst_26 [1] : vector<16x128xf32> to vector<16xf32>
    %47 = vector.shape_cast %46 : vector<16xf32> to vector<16x1xf32>
    %cst_27 = arith.constant 3.125000e-02 : f32
    %48 = vector.broadcast %cst_27 : f32 to vector<16x1xf32>
    %49 = arith.mulf %47, %48 : vector<16x1xf32>
    %cst_28 = arith.constant 9.99999974E-6 : f32
    %50 = vector.broadcast %cst_28 : f32 to vector<16x1xf32>
    %51 = arith.addf %49, %50 : vector<16x1xf32>
    %52 = math.rsqrt %51 : vector<16x1xf32>
    %53 = vector.broadcast %52 : vector<16x1xf32> to vector<16x128xf32>
    %54 = arith.mulf %44, %53 : vector<16x128xf32>
    %c0_29 = arith.constant 0 : index
    %c0_30 = arith.constant 0 : index
    %55 = vector.load %arg8[%c0_29, %c0_30] : memref<1x128xf32, #tpu.memory_space<vmem>>, vector<1x128xf32>
    %56 = vector.broadcast %55 : vector<1x128xf32> to vector<16x128xf32>
    %57 = arith.mulf %54, %56 : vector<16x128xf32>
    %c0_31 = arith.constant 0 : index
    %c0_32 = arith.constant 0 : index
    %58 = vector.load %arg9[%c0_31, %c0_32] : memref<1x128xf32, #tpu.memory_space<vmem>>, vector<1x128xf32>
    %59 = vector.broadcast %58 : vector<1x128xf32> to vector<16x128xf32>
    %60 = arith.addf %57, %59 : vector<16x128xf32>
    %c0_33 = arith.constant 0 : index
    %c0_34 = arith.constant 0 : index
    %61 = vector.load %arg10[%c0_33, %c0_34] : memref<16x128xf32, #tpu.memory_space<vmem>>, vector<16x128xf32>
    tpu.vector_store %arg10[%c0_33, %c0_34], %60 {strides = array<i32>} : memref<16x128xf32, #tpu.memory_space<vmem>>, vector<16x128xf32>,
    return
  }
  func.func @transform_0(%arg0: i32) -> (i32, i32) {
    %c0_i32 = arith.constant 0 : i32
    %c0_i32_0 = arith.constant 0 : i32
    return %arg0, %c0_i32 : i32, i32
  }
  func.func @transform_1(%arg0: i32) -> (i32, i32) {
    %c0_i32 = arith.constant 0 : i32
    %c0_i32_0 = arith.constant 0 : i32
    %c0_i32_1 = arith.constant 0 : i32
    return %c0_i32, %c0_i32_0 : i32, i32
  }
  func.func @transform_2(%arg0: i32) -> (i32, i32) {
    %c0_i32 = arith.constant 0 : i32
    %c0_i32_0 = arith.constant 0 : i32
    %c0_i32_1 = arith.constant 0 : i32
    return %c0_i32, %c0_i32_0 : i32, i32
  }
  func.func @transform_3(%arg0: i32) -> (i32, i32) {
    %c0_i32 = arith.constant 0 : i32
    %c0_i32_0 = arith.constant 0 : i32
    %c0_i32_1 = arith.constant 0 : i32
    return %c0_i32, %c0_i32_0 : i32, i32
  }
  func.func @transform_4(%arg0: i32) -> (i32, i32) {
    %c0_i32 = arith.constant 0 : i32
    %c0_i32_0 = arith.constant 0 : i32
    %c0_i32_1 = arith.constant 0 : i32
    return %c0_i32, %c0_i32_0 : i32, i32
  }
  func.func @transform_5(%arg0: i32) -> (i32, i32) {
    %c0_i32 = arith.constant 0 : i32
    %c0_i32_0 = arith.constant 0 : i32
    %c0_i32_1 = arith.constant 0 : i32
    return %c0_i32, %c0_i32_0 : i32, i32
  }
  func.func @transform_6(%arg0: i32) -> (i32, i32) {
    %c0_i32 = arith.constant 0 : i32
    %c0_i32_0 = arith.constant 0 : i32
    %c0_i32_1 = arith.constant 0 : i32
    return %c0_i32, %c0_i32_0 : i32, i32
  }
  func.func @transform_7(%arg0: i32) -> (i32, i32) {
    %c0_i32 = arith.constant 0 : i32
    %c0_i32_0 = arith.constant 0 : i32
    %c0_i32_1 = arith.constant 0 : i32
    return %c0_i32, %c0_i32_0 : i32, i32
  }
  func.func @transform_8(%arg0: i32) -> (i32, i32) {
    %c0_i32 = arith.constant 0 : i32
    %c0_i32_0 = arith.constant 0 : i32
    %c0_i32_1 = arith.constant 0 : i32
    return %c0_i32, %c0_i32_0 : i32, i32
  }
  func.func @transform_9(%arg0: i32) -> (i32, i32) {
    %c0_i32 = arith.constant 0 : i32
    %c0_i32_0 = arith.constant 0 : i32
    return %arg0, %c0_i32 : i32, i32
  }
}

module attributes {stable_mosaic.version = 11 : i64} {
  func.func @_ffn_kernel(%arg0: i32, %arg1: memref<16x128xf32, #tpu.memory_space<vmem>>, %arg2: memref<128x128xf32, #tpu.memory_space<vmem>>, %arg3: memref<1x128xf32, #tpu.memory_space<vmem>>, %arg4: memref<128x128xf32, #tpu.memory_space<vmem>>, %arg5: memref<1x128xf32, #tpu.memory_space<vmem>>, %arg6: memref<128x128xf32, #tpu.memory_space<vmem>>, %arg7: memref<1x128xf32, #tpu.memory_space<vmem>>, %arg8: memref<1x128xf32, #tpu.memory_space<vmem>>, %arg9: memref<1x128xf32, #tpu.memory_space<vmem>>, %arg10: memref<16x128xf32, #tpu.memory_space<vmem>>) attributes {dimension_semantics = [#tpu.dimension_semantics<parallel>], iteration_bounds = array<i64: 3>, scalar_prefetch = 0 : i64, scratch_operands = 0 : i64, tpu.core_type = #tpu.core_type<tc>, window_params = [{transform_indices = @transform_0, window_bounds = array<i64: 16, 128>}, {pipeline_mode = #tpu.pipeline_mode<synchronous>, transform_indices = @transform_1, window_bounds = array<i64: 128, 128>}, {pipeline_mode = #tpu.pipeline_mode<synchronous>, transform_indices = @transform_2, window_bounds = array<i64: 1, 128>}, {pipeline_mode = #tpu.pipeline_mode<synchronous>, transform_indices = @transform_3, window_bounds = array<i64: 128, 128>}, {pipeline_mode = #tpu.pipeline_mode<synchronous>, transform_indices = @transform_4, window_bounds = array<i64: 1, 128>}, {pipeline_mode = #tpu.pipeline_mode<synchronous>, transform_indices = @transform_5, window_bounds = array<i64: 128, 128>}, {pipeline_mode = #tpu.pipeline_mode<synchronous>, transform_indices = @transform_6, window_bounds = array<i64: 1, 128>}, {pipeline_mode = #tpu.pipeline_mode<synchronous>, transform_indices = @transform_7, window_bounds = array<i64: 1, 128>}, {pipeline_mode = #tpu.pipeline_mode<synchronous>, transform_indices = @transform_8, window_bounds = array<i64: 1, 128>}, {transform_indices = @transform_9, window_bounds = array<i64: 16, 128>}]} {
    %c0 = arith.constant 0 : index
    %c0_0 = arith.constant 0 : index
    %0 = vector.load %arg1[%c0, %c0_0] : memref<16x128xf32, #tpu.memory_space<vmem>>, vector<16x128xf32>
    %c0_1 = arith.constant 0 : index
    %c0_2 = arith.constant 0 : index
    %1 = vector.load %arg2[%c0_1, %c0_2] : memref<128x128xf32, #tpu.memory_space<vmem>>, vector<128x128xf32>
    %cst = arith.constant dense<0.000000e+00> : vector<16x128xf32>
    %2 = tpu.matmul %0, %1, %cst {dimension_numbers = #tpu.dot_dimension_numbers<[1], [0], [0], [1], [0, 0, 1, 1], [], []>} : vector<16x128xf32>, vector<128x128xf32>, vector<16x128xf32> -> vector<16x128xf32>
    %c0_3 = arith.constant 0 : index
    %c0_4 = arith.constant 0 : index
    %3 = vector.load %arg3[%c0_3, %c0_4] : memref<1x128xf32, #tpu.memory_space<vmem>>, vector<1x128xf32>
    %4 = vector.broadcast %3 : vector<1x128xf32> to vector<16x128xf32>
    %5 = arith.addf %2, %4 : vector<16x128xf32>
    %cst_5 = arith.constant 5.000000e-01 : f32
    %6 = vector.broadcast %cst_5 : f32 to vector<16x128xf32>
    %7 = arith.mulf %6, %5 : vector<16x128xf32>
    %cst_6 = arith.constant 0.707106769 : f32
    %8 = vector.broadcast %cst_6 : f32 to vector<16x128xf32>
    %9 = arith.mulf %5, %8 : vector<16x128xf32>
    %10 = math.erf %9 : vector<16x128xf32>
    %cst_7 = arith.constant 1.000000e+00 : f32
    %11 = vector.broadcast %cst_7 : f32 to vector<16x128xf32>
    %12 = arith.addf %11, %10 : vector<16x128xf32>
    %13 = arith.mulf %7, %12 : vector<16x128xf32>
    %c0_8 = arith.constant 0 : index
    %c0_9 = arith.constant 0 : index
    %14 = vector.load %arg4[%c0_8, %c0_9] : memref<128x128xf32, #tpu.memory_space<vmem>>, vector<128x128xf32>
    %cst_10 = arith.constant dense<0.000000e+00> : vector<16x128xf32>
    %15 = tpu.matmul %13, %14, %cst_10 {dimension_numbers = #tpu.dot_dimension_numbers<[1], [0], [0], [1], [0, 0, 1, 1], [], []>} : vector<16x128xf32>, vector<128x128xf32>, vector<16x128xf32> -> vector<16x128xf32>
    %c0_11 = arith.constant 0 : index
    %c0_12 = arith.constant 0 : index
    %16 = vector.load %arg5[%c0_11, %c0_12] : memref<1x128xf32, #tpu.memory_space<vmem>>, vector<1x128xf32>
    %17 = vector.broadcast %16 : vector<1x128xf32> to vector<16x128xf32>
    %18 = arith.addf %15, %17 : vector<16x128xf32>
    %cst_13 = arith.constant 5.000000e-01 : f32
    %19 = vector.broadcast %cst_13 : f32 to vector<16x128xf32>
    %20 = arith.mulf %19, %18 : vector<16x128xf32>
    %cst_14 = arith.constant 0.707106769 : f32
    %21 = vector.broadcast %cst_14 : f32 to vector<16x128xf32>
    %22 = arith.mulf %18, %21 : vector<16x128xf32>
    %23 = math.erf %22 : vector<16x128xf32>
    %cst_15 = arith.constant 1.000000e+00 : f32
    %24 = vector.broadcast %cst_15 : f32 to vector<16x128xf32>
    %25 = arith.addf %24, %23 : vector<16x128xf32>
    %26 = arith.mulf %20, %25 : vector<16x128xf32>
    %c0_16 = arith.constant 0 : index
    %c0_17 = arith.constant 0 : index
    %27 = vector.load %arg6[%c0_16, %c0_17] : memref<128x128xf32, #tpu.memory_space<vmem>>, vector<128x128xf32>
    %cst_18 = arith.constant dense<0.000000e+00> : vector<16x128xf32>
    %28 = tpu.matmul %26, %27, %cst_18 {dimension_numbers = #tpu.dot_dimension_numbers<[1], [0], [0], [1], [0, 0, 1, 1], [], []>} : vector<16x128xf32>, vector<128x128xf32>, vector<16x128xf32> -> vector<16x128xf32>
    %c0_19 = arith.constant 0 : index
    %c0_20 = arith.constant 0 : index
    %29 = vector.load %arg7[%c0_19, %c0_20] : memref<1x128xf32, #tpu.memory_space<vmem>>, vector<1x128xf32>
    %30 = vector.broadcast %29 : vector<1x128xf32> to vector<16x128xf32>
    %31 = arith.addf %28, %30 : vector<16x128xf32>
    %c0_21 = arith.constant 0 : index
    %c0_22 = arith.constant 0 : index
    %32 = vector.load %arg1[%c0_21, %c0_22] : memref<16x128xf32, #tpu.memory_space<vmem>>, vector<16x128xf32>
    %33 = arith.addf %31, %32 : vector<16x128xf32>
    %cst_23 = arith.constant dense<0.000000e+00> : vector<16xf32>
    %34 = vector.multi_reduction <add>, %33, %cst_23 [1] : vector<16x128xf32> to vector<16xf32>
    %35 = vector.shape_cast %34 : vector<16xf32> to vector<16x1xf32>
    %cst_24 = arith.constant 3.125000e-02 : f32
    %36 = vector.broadcast %cst_24 : f32 to vector<16x1xf32>
    %37 = arith.mulf %35, %36 : vector<16x1xf32>
    %38 = tpu.iota {dimensions = array<i32: 1>} : vector<16x128xi32>
    %c32_i32 = arith.constant 32 : i32
    %39 = vector.broadcast %c32_i32 : i32 to vector<16x128xi32>
    %40 = arith.cmpi slt, %38, %39 : vector<16x128xi32>
    %41 = vector.broadcast %37 : vector<16x1xf32> to vector<16x128xf32>
    %42 = arith.subf %33, %41 : vector<16x128xf32>
    %cst_25 = arith.constant 0.000000e+00 : f32
    %43 = vector.broadcast %cst_25 : f32 to vector<16x128xf32>
    %44 = arith.select %40, %42, %43 : vector<16x128xi1>, vector<16x128xf32>
    %45 = arith.mulf %44, %44 : vector<16x128xf32>
    %cst_26 = arith.constant dense<0.000000e+00> : vector<16xf32>
    %46 = vector.multi_reduction <add>, %45, %cst_26 [1] : vector<16x128xf32> to vector<16xf32>
    %47 = vector.shape_cast %46 : vector<16xf32> to vector<16x1xf32>
    %cst_27 = arith.constant 3.125000e-02 : f32
    %48 = vector.broadcast %cst_27 : f32 to vector<16x1xf32>
    %49 = arith.mulf %47, %48 : vector<16x1xf32>
    %cst_28 = arith.constant 9.99999974E-6 : f32
    %50 = vector.broadcast %cst_28 : f32 to vector<16x1xf32>
    %51 = arith.addf %49, %50 : vector<16x1xf32>
    %52 = math.rsqrt %51 : vector<16x1xf32>
    %53 = vector.broadcast %52 : vector<16x1xf32> to vector<16x128xf32>
    %54 = arith.mulf %44, %53 : vector<16x128xf32>
    %c0_29 = arith.constant 0 : index
    %c0_30 = arith.constant 0 : index
    %55 = vector.load %arg8[%c0_29, %c0_30] : memref<1x128xf32, #tpu.memory_space<vmem>>, vector<1x128xf32>
    %56 = vector.broadcast %55 : vector<1x128xf32> to vector<16x128xf32>
    %57 = arith.mulf %54, %56 : vector<16x128xf32>
    %c0_31 = arith.constant 0 : index
    %c0_32 = arith.constant 0 : index
    %58 = vector.load %arg9[%c0_31, %c0_32] : memref<1x128xf32, #tpu.memory_space<vmem>>, vector<1x128xf32>
    %59 = vector.broadcast %58 : vector<1x128xf32> to vector<16x128xf32>
    %60 = arith.addf %57, %59 : vector<16x128xf32>
    %c0_33 = arith.constant 0 : index
    %c0_34 = arith.constant 0 : index
    %61 = vector.load %arg10[%c0_33, %c0_34] : memref<16x128xf32, #tpu.memory_space<vmem>>, vector<16x128xf32>
    tpu.vector_store %arg10[%c0_33, %c0_34], %60 {strides = array<i32>} : memref<16x128xf32, #tpu.memory_space<vmem>>, vector<16x128xf32>,
    return
  }
  func.func @transform_0(%arg0: i32) -> (i32, i32) {
    %c0_i32 = arith.constant 0 : i32
    %c0_i32_0 = arith.constant 0 : i32
    return %arg0, %c0_i32 : i32, i32
  }
  func.func @transform_1(%arg0: i32) -> (i32, i32) {
    %c0_i32 = arith.constant 0 : i32
    %c0_i32_0 = arith.constant 0 : i32
    %c0_i32_1 = arith.constant 0 : i32
    return %c0_i32, %c0_i32_0 : i32, i32
  }
  func.func @transform_2(%arg0: i32) -> (i32, i32) {
    %c0_i32 = arith.constant 0 : i32
    %c0_i32_0 = arith.constant 0 : i32
    %c0_i32_1 = arith.constant 0 : i32
    return %c0_i32, %c0_i32_0 : i32, i32
  }
  func.func @transform_3(%arg0: i32) -> (i32, i32) {
    %c0_i32 = arith.constant 0 : i32
    %c0_i32_0 = arith.constant 0 : i32
    %c0_i32_1 = arith.constant 0 : i32
    return %c0_i32, %c0_i32_0 : i32, i32
  }
  func.func @transform_4(%arg0: i32) -> (i32, i32) {
    %c0_i32 = arith.constant 0 : i32
    %c0_i32_0 = arith.constant 0 : i32
    %c0_i32_1 = arith.constant 0 : i32
    return %c0_i32, %c0_i32_0 : i32, i32
  }
  func.func @transform_5(%arg0: i32) -> (i32, i32) {
    %c0_i32 = arith.constant 0 : i32
    %c0_i32_0 = arith.constant 0 : i32
    %c0_i32_1 = arith.constant 0 : i32
    return %c0_i32, %c0_i32_0 : i32, i32
  }
  func.func @transform_6(%arg0: i32) -> (i32, i32) {
    %c0_i32 = arith.constant 0 : i32
    %c0_i32_0 = arith.constant 0 : i32
    %c0_i32_1 = arith.constant 0 : i32
    return %c0_i32, %c0_i32_0 : i32, i32
  }
  func.func @transform_7(%arg0: i32) -> (i32, i32) {
    %c0_i32 = arith.constant 0 : i32
    %c0_i32_0 = arith.constant 0 : i32
    %c0_i32_1 = arith.constant 0 : i32
    return %c0_i32, %c0_i32_0 : i32, i32
  }
  func.func @transform_8(%arg0: i32) -> (i32, i32) {
    %c0_i32 = arith.constant 0 : i32
    %c0_i32_0 = arith.constant 0 : i32
    %c0_i32_1 = arith.constant 0 : i32
    return %c0_i32, %c0_i32_0 : i32, i32
  }
  func.func @transform_9(%arg0: i32) -> (i32, i32) {
    %c0_i32 = arith.constant 0 : i32
    %c0_i32_0 = arith.constant 0 : i32
    return %arg0, %c0_i32 : i32, i32
  }
}

</mosaic_0001>

<llo_original>
// kernel: tpu_custom_call.1
$region0: #{tpu_custom_call.1}
  #allocation0 [shape = 'u32[]', space=smem, size = 0x4, offset = 0x4, fixed_abs, tag = 'smem constant byte address 0x4 - core index']
  #allocation1 [shape = 'u32[144,128]{1,0:T(1,128)}', space=vmem, size = 0x12000, scoped, tag = 'internal scratch']
  %s0 = inlined_call_operand.hbm [shape: f32[48,128], index: 0, kind: input, shape index: {}]
  %s1 = inlined_call_operand.hbm [shape: f32[128,128], index: 1, kind: input, shape index: {}]
  %s2 = inlined_call_operand.hbm [shape: f32[1,128], index: 2, kind: input, shape index: {}]
  %s3 = inlined_call_operand.hbm [shape: f32[128,128], index: 3, kind: input, shape index: {}]
  %s4 = inlined_call_operand.hbm [shape: f32[1,128], index: 4, kind: input, shape index: {}]
  %s5 = inlined_call_operand.hbm [shape: f32[128,128], index: 5, kind: input, shape index: {}]
  %s6 = inlined_call_operand.hbm [shape: f32[1,128], index: 6, kind: input, shape index: {}]
  %s7 = inlined_call_operand.hbm [shape: f32[1,128], index: 7, kind: input, shape index: {}]
  %s8 = inlined_call_operand.hbm [shape: f32[1,128], index: 8, kind: input, shape index: {}]
  %s9 = inlined_call_operand.hbm [shape: f32[48,128], index: 9, kind: output, shape index: {}]
  %s10 = sld [smem:[#allocation0]]
  $region105: #{tpu_custom_call.1} parent=0
    _
  %s12 = ssub.s32 1, %s10
  %s13 = scalar_select 0, %s12, %s10
  $region1: #{tpu_custom_call.1} parent=0
    #allocation2 [shape = 'u8[16384]{0}', space=vmem, size = 0x4000, scoped, tag = 'input window, operand 0']
    #allocation3 [shape = 's32[2]{0}', space=sflag, size = 0x8, scoped, tag = 'scoped memory for tpu_custom_call.1']
    #allocation4 [shape = 's32[2]{0}', space=sflag, size = 0x8, scoped, tag = 'scoped memory for tpu_custom_call.1']
    #allocation5 [shape = 'u8[65536]{0}', space=vmem, size = 0x10000, scoped, tag = 'input window, operand 1, single buffered']
    #allocation6 [shape = 's32[1]{0}', space=sflag, size = 0x4, scoped, tag = 'scoped memory for tpu_custom_call.1']
    #allocation7 [shape = 'u8[512]{0}', space=vmem, size = 0x400, scoped, tag = 'input window, operand 2, single buffered']
    #allocation8 [shape = 'u8[65536]{0}', space=vmem, size = 0x10000, scoped, tag = 'input window, operand 3, single buffered']
    #allocation9 [shape = 's32[1]{0}', space=sflag, size = 0x4, scoped, tag = 'scoped memory for tpu_custom_call.1']
    #allocation10 [shape = 'u8[512]{0}', space=vmem, size = 0x400, scoped, tag = 'input window, operand 4, single buffered']
    #allocation11 [shape = 'u8[65536]{0}', space=vmem, size = 0x10000, scoped, tag = 'input window, operand 5, single buffered']
    #allocation12 [shape = 's32[1]{0}', space=sflag, size = 0x4, scoped, tag = 'scoped memory for tpu_custom_call.1']
    #allocation13 [shape = 'u8[512]{0}', space=vmem, size = 0x400, scoped, tag = 'input window, operand 6, single buffered']
    #allocation14 [shape = 'u8[512]{0}', space=vmem, size = 0x400, scoped, tag = 'input window, operand 7, single buffered']
    #allocation15 [shape = 's32[1]{0}', space=sflag, size = 0x4, scoped, tag = 'scoped memory for tpu_custom_call.1']
    #allocation16 [shape = 'u8[512]{0}', space=vmem, size = 0x400, scoped, tag = 'input window, operand 8, single buffered']
    #allocation17 [shape = 'u8[16384]{0}', space=vmem, size = 0x4000, scoped, tag = 'output window, operand 0']
    %14 = vsyncpa [#allocation3], 0
    %s15 = scalar_lea.sflag [#allocation3], 1
    %16 = vsyncpa %s15, 0
    %17 = vsyncpa [#allocation6], 0
    %18 = vsyncpa [#allocation9], 0
    %19 = vsyncpa [#allocation12], 0
    %20 = vsyncpa [#allocation15], 0
    %21 = vsyncpa [#allocation4], 0
    %s22 = scalar_lea.sflag [#allocation4], 1
    %23 = vsyncpa %s22, 0
    loop: start=0, step=1, limit=5
    $region2: #{tpu_custom_call.1} parent=1 // loop_pre_header
      _
    $region3: #{tpu_custom_call.1} parent=1 // loop_header
      %s25 = sphi 0, %s29
      %p26 = scmp.ge.s32.totalorder %s25, 5
      %s35 = sphi 0, %s37
      %s38 = sphi 0, %s35
      %s39 = sphi 0, %s38
      %s55 = sphi 0, %s39
      %s59 = sphi 0, %s59
      %s61 = sphi 0, %s59
      %s62 = sphi 0, %s61
      %s76 = sphi 0, %s62
      %s80 = sphi 0, %s80
      %s82 = sphi 0, %s80
      %s83 = sphi 0, %s82
      %s97 = sphi 0, %s83
      %s101 = sphi 0, %s101
      %s103 = sphi 0, %s101
      %s104 = sphi 0, %s103
      %s118 = sphi 0, %s104
      %s122 = sphi 0, %s122
      %s124 = sphi 0, %s122
      %s125 = sphi 0, %s124
      %s139 = sphi 0, %s125
      %s143 = sphi 0, %s143
      %s145 = sphi 0, %s143
      %s146 = sphi 0, %s145
      %s160 = sphi 0, %s146
      %s164 = sphi 0, %s164
      %s166 = sphi 0, %s164
      %s167 = sphi 0, %s166
      %s181 = sphi 0, %s167
      %s185 = sphi 0, %s185
      %s187 = sphi 0, %s185
      %s188 = sphi 0, %s187
      %s202 = sphi 0, %s188
      %s206 = sphi 0, %s206
      %s208 = sphi 0, %s206
      %s209 = sphi 0, %s208
      %s223 = sphi 0, %s209
      %s229 = sphi 0, %s231
      %s232 = sphi 0, %s229
      %s233 = sphi 0, %s232
      %s249 = sphi 0, %s233
    $region4: #{tpu_custom_call.1} parent=1 // loop_header_branch
      %28 = sbr.rel (%p26) target = $region8
    $region5: #{tpu_custom_call.1} parent=1 // loop_body
      %s30 = ssub.s32 %s25, 1
      %s31 = ssub.s32 %s25, 2
      %s32 = sadd.s32 %s25, 1
      %s33 = ssub.s32 %s25, %s32
      %p34 = scmp.eq.s32.totalorder %s33, 0
      %s36 = sadd.s32 %s35, 1
      %s37 = scalar_select %p34, %s35, %s36
      %p40 = pneg %p34
      %p41 = scmp.eq.s32.totalorder %s25, 2
      %p42 = por %p40, %p41
      %p43 = scmp.ne.s32.totalorder %s35, %s38
      %p44 = scmp.eq.s32.totalorder %s25, 0
      %p45 = por %p43, %p44
      %p46 = scmp.ne.s32.totalorder %s35, %s38
      %p47 = scmp.eq.s32.totalorder %s30, 2
      %p48 = por %p46, %p47
      %p49 = scmp.ne.s32.totalorder %s38, %s39
      %p50 = scmp.eq.s32.totalorder %s30, 0
      %p51 = por %p49, %p50
      %p52 = scmp.ne.s32.totalorder %s38, %s39
      %p53 = scmp.eq.s32.totalorder %s31, 2
      %p54 = por %p52, %p53
      %p56 = scmp.ne.s32.totalorder %s39, %s55
      %p57 = scmp.eq.s32.totalorder %s31, 0
      %p58 = por %p56, %p57
      %s60 = sadd.s32 %s59, 1
      %p63 = scmp.eq.s32.totalorder %s25, 2
      %p64 = scmp.ne.s32.totalorder %s59, %s61
      %p65 = scmp.eq.s32.totalorder %s25, 0
      %p66 = por %p64, %p65
      %p67 = scmp.ne.s32.totalorder %s59, %s61
      %p68 = scmp.eq.s32.totalorder %s30, 2
      %p69 = por %p67, %p68
      %p70 = scmp.ne.s32.totalorder %s61, %s62
      %p71 = scmp.eq.s32.totalorder %s30, 0
      %p72 = por %p70, %p71
      %p73 = scmp.ne.s32.totalorder %s61, %s62
      %p74 = scmp.eq.s32.totalorder %s31, 2
      %p75 = por %p73, %p74
      %p77 = scmp.ne.s32.totalorder %s62, %s76
      %p78 = scmp.eq.s32.totalorder %s31, 0
      %p79 = por %p77, %p78
      %s81 = sadd.s32 %s80, 1
      %p84 = scmp.eq.s32.totalorder %s25, 2
      %p85 = scmp.ne.s32.totalorder %s80, %s82
      %p86 = scmp.eq.s32.totalorder %s25, 0
      %p87 = por %p85, %p86
      %p88 = scmp.ne.s32.totalorder %s80, %s82
      %p89 = scmp.eq.s32.totalorder %s30, 2
      %p90 = por %p88, %p89
      %p91 = scmp.ne.s32.totalorder %s82, %s83
      %p92 = scmp.eq.s32.totalorder %s30, 0
      %p93 = por %p91, %p92
      %p94 = scmp.ne.s32.totalorder %s82, %s83
      %p95 = scmp.eq.s32.totalorder %s31, 2
      %p96 = por %p94, %p95
      %p98 = scmp.ne.s32.totalorder %s83, %s97
      %p99 = scmp.eq.s32.totalorder %s31, 0
      %p100 = por %p98, %p99
      %s102 = sadd.s32 %s101, 1
      %p105 = scmp.eq.s32.totalorder %s25, 2
      %p106 = scmp.ne.s32.totalorder %s101, %s103
      %p107 = scmp.eq.s32.totalorder %s25, 0
      %p108 = por %p106, %p107
      %p109 = scmp.ne.s32.totalorder %s101, %s103
      %p110 = scmp.eq.s32.totalorder %s30, 2
      %p111 = por %p109, %p110
      %p112 = scmp.ne.s32.totalorder %s103, %s104
      %p113 = scmp.eq.s32.totalorder %s30, 0
      %p114 = por %p112, %p113
      %p115 = scmp.ne.s32.totalorder %s103, %s104
      %p116 = scmp.eq.s32.totalorder %s31, 2
      %p117 = por %p115, %p116
      %p119 = scmp.ne.s32.totalorder %s104, %s118
      %p120 = scmp.eq.s32.totalorder %s31, 0
      %p121 = por %p119, %p120
      %s123 = sadd.s32 %s122, 1
      %p126 = scmp.eq.s32.totalorder %s25, 2
      %p127 = scmp.ne.s32.totalorder %s122, %s124
      %p128 = scmp.eq.s32.totalorder %s25, 0
      %p129 = por %p127, %p128
      %p130 = scmp.ne.s32.totalorder %s122, %s124
      %p131 = scmp.eq.s32.totalorder %s30, 2
      %p132 = por %p130, %p131
      %p133 = scmp.ne.s32.totalorder %s124, %s125
      %p134 = scmp.eq.s32.totalorder %s30, 0
      %p135 = por %p133, %p134
      %p136 = scmp.ne.s32.totalorder %s124, %s125
      %p137 = scmp.eq.s32.totalorder %s31, 2
      %p138 = por %p136, %p137
      %p140 = scmp.ne.s32.totalorder %s125, %s139
      %p141 = scmp.eq.s32.totalorder %s31, 0
      %p142 = por %p140, %p141
      %s144 = sadd.s32 %s143, 1
      %p147 = scmp.eq.s32.totalorder %s25, 2
      %p148 = scmp.ne.s32.totalorder %s143, %s145
      %p149 = scmp.eq.s32.totalorder %s25, 0
      %p150 = por %p148, %p149
      %p151 = scmp.ne.s32.totalorder %s143, %s145
      %p152 = scmp.eq.s32.totalorder %s30, 2
      %p153 = por %p151, %p152
      %p154 = scmp.ne.s32.totalorder %s145, %s146
      %p155 = scmp.eq.s32.totalorder %s30, 0
      %p156 = por %p154, %p155
      %p157 = scmp.ne.s32.totalorder %s145, %s146
      %p158 = scmp.eq.s32.totalorder %s31, 2
      %p159 = por %p157, %p158
      %p161 = scmp.ne.s32.totalorder %s146, %s160
      %p162 = scmp.eq.s32.totalorder %s31, 0
      %p163 = por %p161, %p162
      %s165 = sadd.s32 %s164, 1
      %p168 = scmp.eq.s32.totalorder %s25, 2
      %p169 = scmp.ne.s32.totalorder %s164, %s166
      %p170 = scmp.eq.s32.totalorder %s25, 0
      %p171 = por %p169, %p170
      %p172 = scmp.ne.s32.totalorder %s164, %s166
      %p173 = scmp.eq.s32.totalorder %s30, 2
      %p174 = por %p172, %p173
      %p175 = scmp.ne.s32.totalorder %s166, %s167
      %p176 = scmp.eq.s32.totalorder %s30, 0
      %p177 = por %p175, %p176
      %p178 = scmp.ne.s32.totalorder %s166, %s167
      %p179 = scmp.eq.s32.totalorder %s31, 2
      %p180 = por %p178, %p179
      %p182 = scmp.ne.s32.totalorder %s167, %s181
      %p183 = scmp.eq.s32.totalorder %s31, 0
      %p184 = por %p182, %p183
      %s186 = sadd.s32 %s185, 1
      %p189 = scmp.eq.s32.totalorder %s25, 2
      %p190 = scmp.ne.s32.totalorder %s185, %s187
      %p191 = scmp.eq.s32.totalorder %s25, 0
      %p192 = por %p190, %p191
      %p193 = scmp.ne.s32.totalorder %s185, %s187
      %p194 = scmp.eq.s32.totalorder %s30, 2
      %p195 = por %p193, %p194
      %p196 = scmp.ne.s32.totalorder %s187, %s188
      %p197 = scmp.eq.s32.totalorder %s30, 0
      %p198 = por %p196, %p197
      %p199 = scmp.ne.s32.totalorder %s187, %s188
      %p200 = scmp.eq.s32.totalorder %s31, 2
      %p201 = por %p199, %p200
      %p203 = scmp.ne.s32.totalorder %s188, %s202
      %p204 = scmp.eq.s32.totalorder %s31, 0
      %p205 = por %p203, %p204
      %s207 = sadd.s32 %s206, 1
      %p210 = scmp.eq.s32.totalorder %s25, 2
      %p211 = scmp.ne.s32.totalorder %s206, %s208
      %p212 = scmp.eq.s32.totalorder %s25, 0
      %p213 = por %p211, %p212
      %p214 = scmp.ne.s32.totalorder %s206, %s208
      %p215 = scmp.eq.s32.totalorder %s30, 2
      %p216 = por %p214, %p215
      %p217 = scmp.ne.s32.totalorder %s208, %s209
      %p218 = scmp.eq.s32.totalorder %s30, 0
      %p219 = por %p217, %p218
      %p220 = scmp.ne.s32.totalorder %s208, %s209
      %p221 = scmp.eq.s32.totalorder %s31, 2
      %p222 = por %p220, %p221
      %p224 = scmp.ne.s32.totalorder %s209, %s223
      %p225 = scmp.eq.s32.totalorder %s31, 0
      %p226 = por %p224, %p225
      %s227 = ssub.s32 %s25, %s32
      %p228 = scmp.eq.s32.totalorder %s227, 0
      %s230 = sadd.s32 %s229, 1
      %s231 = scalar_select %p228, %s229, %s230
      %p234 = pneg %p228
      %p235 = scmp.eq.s32.totalorder %s25, 2
      %p236 = por %p234, %p235
      %p237 = scmp.ne.s32.totalorder %s229, %s232
      %p238 = scmp.eq.s32.totalorder %s25, 0
      %p239 = por %p237, %p238
      %p240 = scmp.ne.s32.totalorder %s229, %s232
      %p241 = scmp.eq.s32.totalorder %s30, 2
      %p242 = por %p240, %p241
      %p243 = scmp.ne.s32.totalorder %s232, %s233
      %p244 = scmp.eq.s32.totalorder %s30, 0
      %p245 = por %p243, %p244
      %p246 = scmp.ne.s32.totalorder %s232, %s233
      %p247 = scmp.eq.s32.totalorder %s31, 2
      %p248 = por %p246, %p247
      %p250 = scmp.ne.s32.totalorder %s233, %s249
      %p251 = scmp.eq.s32.totalorder %s31, 0
      %p252 = por %p250, %p251
      %p253 = scmp.le.s32.totalorder 1, %s25
      %p254 = scmp.lt.s32.totalorder %s25, 4
      %p255 = pnand %p253, %p254
      %p256 = pneg %p255
      // Predicated region
      $region9: #{tpu_custom_call.1} parent=5 // pred_check
        _
      $region10: #{tpu_custom_call.1} parent=5 // pred_check_branch
        %258 = sbr.rel (%p255) target = $region12
      $region11: #{tpu_custom_call.1} parent=5 // pred_region
        %s259 = ssub.s32 %s25, 1
        // Predicated region
        $region13: #{tpu_custom_call.1} parent=11 // pred_check
          %p260 = pneg %p72
        $region14: #{tpu_custom_call.1} parent=11 // pred_check_branch
          %262 = sbr.rel (%p260) target = $region16
        $region15: #{tpu_custom_call.1} parent=11 // pred_region
          %s264 = ssub.s32 2048, 2048
          %265 = vsyncadd [#allocation6], %s264
          %s266 = sshll.u32 [#allocation5], 4
          %s267 = int_to_ptr.vmem [resolvable:$true] %s266
          %272 = dma.hbm_to_vmem [thread:$0]  %s1, 2048, %s267, [#allocation6], 128, 128, 8
        $region16: #{tpu_custom_call.1} parent=11 // pred_fallthru
          _
        // Predicated region
        $region17: #{tpu_custom_call.1} parent=11 // pred_check
          %p273 = pneg %p93
        $region18: #{tpu_custom_call.1} parent=11 // pred_check_branch
          %275 = sbr.rel (%p273) target = $region20
        $region19: #{tpu_custom_call.1} parent=11 // pred_region
          %s277 = ssub.s32 16, 16
          %278 = vsyncadd [#allocation6], %s277
          %s280 = sshll.u32 [#allocation7], 4
          %s281 = int_to_ptr.vmem [resolvable:$true] %s280
          %283 = dma.hbm_to_vmem [thread:$0]  %s2, 16, %s281, [#allocation6]
        $region20: #{tpu_custom_call.1} parent=11 // pred_fallthru
          _
        // Predicated region
        $region21: #{tpu_custom_call.1} parent=11 // pred_check
          %p284 = pneg %p114
        $region22: #{tpu_custom_call.1} parent=11 // pred_check_branch
          %286 = sbr.rel (%p284) target = $region24
        $region23: #{tpu_custom_call.1} parent=11 // pred_region
          %s288 = ssub.s32 2048, 2048
          %289 = vsyncadd [#allocation9], %s288
          %s290 = sshll.u32 [#allocation8], 4
          %s291 = int_to_ptr.vmem [resolvable:$true] %s290
          %296 = dma.hbm_to_vmem [thread:$0]  %s3, 2048, %s291, [#allocation9], 128, 128, 8
        $region24: #{tpu_custom_call.1} parent=11 // pred_fallthru
          _
        // Predicated region
        $region25: #{tpu_custom_call.1} parent=11 // pred_check
          %p297 = pneg %p135
        $region26: #{tpu_custom_call.1} parent=11 // pred_check_branch
          %299 = sbr.rel (%p297) target = $region28
        $region27: #{tpu_custom_call.1} parent=11 // pred_region
          %s301 = ssub.s32 16, 16
          %302 = vsyncadd [#allocation9], %s301
          %s304 = sshll.u32 [#allocation10], 4
          %s305 = int_to_ptr.vmem [resolvable:$true] %s304
          %307 = dma.hbm_to_vmem [thread:$0]  %s4, 16, %s305, [#allocation9]
        $region28: #{tpu_custom_call.1} parent=11 // pred_fallthru
          _
        // Predicated region
        $region29: #{tpu_custom_call.1} parent=11 // pred_check
          %p308 = pneg %p156
        $region30: #{tpu_custom_call.1} parent=11 // pred_check_branch
          %310 = sbr.rel (%p308) target = $region32
        $region31: #{tpu_custom_call.1} parent=11 // pred_region
          %s312 = ssub.s32 2048, 2048
          %313 = vsyncadd [#allocation12], %s312
          %s314 = sshll.u32 [#allocation11], 4
          %s315 = int_to_ptr.vmem [resolvable:$true] %s314
          %320 = dma.hbm_to_vmem [thread:$0]  %s5, 2048, %s315, [#allocation12], 128, 128, 8
        $region32: #{tpu_custom_call.1} parent=11 // pred_fallthru
          _
        // Predicated region
        $region33: #{tpu_custom_call.1} parent=11 // pred_check
          %p321 = pneg %p177
        $region34: #{tpu_custom_call.1} parent=11 // pred_check_branch
          %323 = sbr.rel (%p321) target = $region36
        $region35: #{tpu_custom_call.1} parent=11 // pred_region
          %s325 = ssub.s32 16, 16
          %326 = vsyncadd [#allocation12], %s325
          %s328 = sshll.u32 [#allocation13], 4
          %s329 = int_to_ptr.vmem [resolvable:$true] %s328
          %331 = dma.hbm_to_vmem [thread:$0]  %s6, 16, %s329, [#allocation12]
        $region36: #{tpu_custom_call.1} parent=11 // pred_fallthru
          _
        // Predicated region
        $region37: #{tpu_custom_call.1} parent=11 // pred_check
          %p332 = pneg %p198
        $region38: #{tpu_custom_call.1} parent=11 // pred_check_branch
          %334 = sbr.rel (%p332) target = $region40
        $region39: #{tpu_custom_call.1} parent=11 // pred_region
          %s336 = ssub.s32 16, 16
          %337 = vsyncadd [#allocation15], %s336
          %s339 = sshll.u32 [#allocation14], 4
          %s340 = int_to_ptr.vmem [resolvable:$true] %s339
          %342 = dma.hbm_to_vmem [thread:$0]  %s7, 16, %s340, [#allocation15]
        $region40: #{tpu_custom_call.1} parent=11 // pred_fallthru
          _
        // Predicated region
        $region41: #{tpu_custom_call.1} parent=11 // pred_check
          %p343 = pneg %p219
        $region42: #{tpu_custom_call.1} parent=11 // pred_check_branch
          %345 = sbr.rel (%p343) target = $region44
        $region43: #{tpu_custom_call.1} parent=11 // pred_region
          %s347 = ssub.s32 16, 16
          %348 = vsyncadd [#allocation15], %s347
          %s350 = sshll.u32 [#allocation16], 4
          %s351 = int_to_ptr.vmem [resolvable:$true] %s350
          %353 = dma.hbm_to_vmem [thread:$0]  %s8, 16, %s351, [#allocation15]
        $region44: #{tpu_custom_call.1} parent=11 // pred_fallthru
          _
      $region12: #{tpu_custom_call.1} parent=5 // pred_fallthru
        _
      %p354 = scmp.lt.s32.totalorder %s25, 3
      // Predicated region
      $region45: #{tpu_custom_call.1} parent=5 // pred_check
        %p355 = pneg %p354
      $region46: #{tpu_custom_call.1} parent=5 // pred_check_branch
        %357 = sbr.rel (%p355) target = $region48
      $region47: #{tpu_custom_call.1} parent=5 // pred_region
        // Predicated region
        $region49: #{tpu_custom_call.1} parent=47 // pred_check
          %p358 = pneg %p45
        $region50: #{tpu_custom_call.1} parent=47 // pred_check_branch
          %360 = sbr.rel (%p358) target = $region52
        $region51: #{tpu_custom_call.1} parent=47 // pred_region
          %s361 = sand.u32 %s35, 1
          %s362 = scalar_lea.sflag [#allocation3], %s361
          %s363 = sand.u32 %s35, 1
          %s364 = smul.addr %s363, 16
          %s365 = scalar_lea.vmem [#allocation2], %s364
          %s366 = smul.u32 2, %s25
          %s368 = ssub.s32 256, 256
          %369 = vsyncadd %s362, %s368
          %s370 = smul.addr %s366, 128
          %s371 = scalar_lea.hbm %s0, %s370
          %s372 = sshll.u32 %s365, 4
          %s373 = int_to_ptr.vmem [resolvable:$true] %s372
          %378 = dma.hbm_to_vmem [thread:$0]  %s371, 256, %s373, %s362, 128, 128, 8
        $region52: #{tpu_custom_call.1} parent=47 // pred_fallthru
          _
      $region48: #{tpu_custom_call.1} parent=5 // pred_fallthru
        _
      %p379 = scmp.le.s32.totalorder 1, %s25
      %p380 = scmp.lt.s32.totalorder %s25, 4
      %p381 = pnand %p379, %p380
      %p382 = pneg %p381
      // Predicated region
      $region53: #{tpu_custom_call.1} parent=5 // pred_check
        _
      $region54: #{tpu_custom_call.1} parent=5 // pred_check_branch
        %384 = sbr.rel (%p381) target = $region56
      $region55: #{tpu_custom_call.1} parent=5 // pred_region
        %s385 = ssub.s32 %s25, 1
        %s386 = sand.u32 %s38, 1
        %s387 = scalar_lea.sflag [#allocation3], %s386
        %s388 = sand.u32 %s38, 1
        %s389 = smul.addr %s388, 16
        %s390 = scalar_lea.vmem [#allocation2], %s389
        // Predicated region
        $region57: #{tpu_custom_call.1} parent=55 // pred_check
          %p391 = pneg %p51
        $region58: #{tpu_custom_call.1} parent=55 // pred_check_branch
          %393 = sbr.rel (%p391) target = $region60
        $region59: #{tpu_custom_call.1} parent=55 // pred_region
          %394 = dma.done %s387, 256
        $region60: #{tpu_custom_call.1} parent=55 // pred_fallthru
          _
        // Predicated region
        $region61: #{tpu_custom_call.1} parent=55 // pred_check
          %p395 = pneg %p72
        $region62: #{tpu_custom_call.1} parent=55 // pred_check_branch
          %397 = sbr.rel (%p395) target = $region64
        $region63: #{tpu_custom_call.1} parent=55 // pred_region
          %398 = dma.done [#allocation6], 2048
        $region64: #{tpu_custom_call.1} parent=55 // pred_fallthru
          _
        // Predicated region
        $region65: #{tpu_custom_call.1} parent=55 // pred_check
          %p399 = pneg %p93
        $region66: #{tpu_custom_call.1} parent=55 // pred_check_branch
          %401 = sbr.rel (%p399) target = $region68
        $region67: #{tpu_custom_call.1} parent=55 // pred_region
          %402 = dma.done [#allocation6], 16
        $region68: #{tpu_custom_call.1} parent=55 // pred_fallthru
          _
        // Predicated region
        $region69: #{tpu_custom_call.1} parent=55 // pred_check
          %p403 = pneg %p114
        $region70: #{tpu_custom_call.1} parent=55 // pred_check_branch
          %405 = sbr.rel (%p403) target = $region72
        $region71: #{tpu_custom_call.1} parent=55 // pred_region
          %406 = dma.done [#allocation9], 2048
        $region72: #{tpu_custom_call.1} parent=55 // pred_fallthru
          _
        // Predicated region
        $region73: #{tpu_custom_call.1} parent=55 // pred_check
          %p407 = pneg %p135
        $region74: #{tpu_custom_call.1} parent=55 // pred_check_branch
          %409 = sbr.rel (%p407) target = $region76
        $region75: #{tpu_custom_call.1} parent=55 // pred_region
          %410 = dma.done [#allocation9], 16
        $region76: #{tpu_custom_call.1} parent=55 // pred_fallthru
          _
        // Predicated region
        $region77: #{tpu_custom_call.1} parent=55 // pred_check
          %p411 = pneg %p156
        $region78: #{tpu_custom_call.1} parent=55 // pred_check_branch
          %413 = sbr.rel (%p411) target = $region80
        $region79: #{tpu_custom_call.1} parent=55 // pred_region
          %414 = dma.done [#allocation12], 2048
        $region80: #{tpu_custom_call.1} parent=55 // pred_fallthru
          _
        // Predicated region
        $region81: #{tpu_custom_call.1} parent=55 // pred_check
          %p415 = pneg %p177
        $region82: #{tpu_custom_call.1} parent=55 // pred_check_branch
          %417 = sbr.rel (%p415) target = $region84
        $region83: #{tpu_custom_call.1} parent=55 // pred_region
          %418 = dma.done [#allocation12], 16
        $region84: #{tpu_custom_call.1} parent=55 // pred_fallthru
          _
        // Predicated region
        $region85: #{tpu_custom_call.1} parent=55 // pred_check
          %p419 = pneg %p198
        $region86: #{tpu_custom_call.1} parent=55 // pred_check_branch
          %421 = sbr.rel (%p419) target = $region88
        $region87: #{tpu_custom_call.1} parent=55 // pred_region
          %422 = dma.done [#allocation15], 16
        $region88: #{tpu_custom_call.1} parent=55 // pred_fallthru
          _
        // Predicated region
        $region89: #{tpu_custom_call.1} parent=55 // pred_check
          %p423 = pneg %p219
        $region90: #{tpu_custom_call.1} parent=55 // pred_check_branch
          %425 = sbr.rel (%p423) target = $region92
        $region91: #{tpu_custom_call.1} parent=55 // pred_region
          %426 = dma.done [#allocation15], 16
        $region92: #{tpu_custom_call.1} parent=55 // pred_fallthru
          _
        %s427 = sand.u32 %s38, 1
        %s428 = scalar_lea.sflag [#allocation3], %s427
        %s429 = sand.u32 %s38, 1
        %s430 = smul.addr %s429, 16
        %s431 = scalar_lea.vmem [#allocation2], %s430
        %p432 = pneg %p51
        %p433 = pneg %p48
        %p434 = pneg %p72
        %p435 = pneg %p69
        %p436 = pneg %p93
        %p437 = pneg %p90
        %p438 = pneg %p114
        %p439 = pneg %p111
        %p440 = pneg %p135
        %p441 = pneg %p132
        %p442 = pneg %p156
        %p443 = pneg %p153
        %p444 = pneg %p177
        %p445 = pneg %p174
        %p446 = pneg %p198
        %p447 = pneg %p195
        %p448 = pneg %p219
        %p449 = pneg %p216
        %p450 = pneg %p245
        %p451 = pneg %p242
        %s452 = sand.u32 %s232, 1
        %s453 = scalar_lea.sflag [#allocation4], %s452
        %s454 = sand.u32 %s232, 1
        %s455 = smul.addr %s454, 16
        %s456 = scalar_lea.vmem [#allocation17], %s455
        %s457 = smul.u32 2, %s30
        %s458 = smul.u32 2, %s30
        %v459 = vld [vmem:[%s390] sm:$0xff]
        %v460 = vld [vmem:[%s390 + $0x8] sm:$0xff]
        %v461 = vld [vmem:[#allocation5] sm:$0xff]
        %v462 = vld [vmem:[#allocation5 + $0x8] sm:$0xff]
        %v463 = vld [vmem:[#allocation5 + $0x10] sm:$0xff]
        %v464 = vld [vmem:[#allocation5 + $0x18] sm:$0xff]
        %v465 = vld [vmem:[#allocation5 + $0x20] sm:$0xff]
        %v466 = vld [vmem:[#allocation5 + $0x28] sm:$0xff]
        %v467 = vld [vmem:[#allocation5 + $0x30] sm:$0xff]
        %v468 = vld [vmem:[#allocation5 + $0x38] sm:$0xff]
        %v469 = vld [vmem:[#allocation5 + $0x40] sm:$0xff]
        %v470 = vld [vmem:[#allocation5 + $0x48] sm:$0xff]
        %v471 = vld [vmem:[#allocation5 + $0x50] sm:$0xff]
        %v472 = vld [vmem:[#allocation5 + $0x58] sm:$0xff]
        %v473 = vld [vmem:[#allocation5 + $0x60] sm:$0xff]
        %v474 = vld [vmem:[#allocation5 + $0x68] sm:$0xff]
        %v475 = vld [vmem:[#allocation5 + $0x70] sm:$0xff]
        %v476 = vld [vmem:[#allocation5 + $0x78] sm:$0xff]
        %v477 = vld [vmem:[#allocation7] sm:$0x1]
        %v479 = vlaneseq
        %v480 = vshrl.u32 %v479, 7
        %v481 = vsub.s32 0, %v480
        %v482 = vrot.slane %v477, %v481
        %484 = vmatprep.subr.mxu0 0.0
        %485 = vmatpush1.msra.mxu0 %v461
        %486 = vmatprep.subr.mxu0 0.0
        %487 = vmatpush1.msra.mxu0 %v462
        %488 = vmatprep.subr.mxu0 0.0
        %489 = vmatpush1.msra.mxu0 %v463
        %490 = vmatprep.subr.mxu0 0.0
        %491 = vmatpush1.msra.mxu0 %v464
        %492 = vmatprep.subr.mxu0 0.0
        %493 = vmatpush1.msra.mxu0 %v465
        %494 = vmatprep.subr.mxu0 0.0
        %495 = vmatpush1.msra.mxu0 %v466
        %496 = vmatprep.subr.mxu0 0.0
        %497 = vmatpush1.msra.mxu0 %v467
        %498 = vmatprep.subr.mxu0 0.0
        %499 = vmatpush1.msra.mxu0 %v468
        %500 = vmatprep.subr.mxu0 0.0
        %501 = vmatpush1.msra.mxu0 %v469
        %502 = vmatprep.subr.mxu0 0.0
        %503 = vmatpush1.msra.mxu0 %v470
        %504 = vmatprep.subr.mxu0 0.0
        %505 = vmatpush1.msra.mxu0 %v471
        %506 = vmatprep.subr.mxu0 0.0
        %507 = vmatpush1.msra.mxu0 %v472
        %508 = vmatprep.subr.mxu0 0.0
        %509 = vmatpush1.msra.mxu0 %v473
        %510 = vmatprep.subr.mxu0 0.0
        %511 = vmatpush1.msra.mxu0 %v474
        %512 = vmatprep.subr.mxu0 0.0
        %513 = vmatpush1.msra.mxu0 %v475
        %514 = vmatprep.subr.mxu0 0.0
        %515 = vmatpush1.msra.mxu0 %v476
        %516 = vmatprep.subr.mxu0 0.0
        %517 = vmatpush1.msra.mxu0 0.0
        %518 = vmatprep.subr.mxu0 0.0
        %519 = vmatpush1.msra.mxu0 0.0
        %520 = vmatprep.subr.mxu0 0.0
        %521 = vmatpush1.msra.mxu0 0.0
        %522 = vmatprep.subr.mxu0 0.0
        %523 = vmatpush1.msra.mxu0 0.0
        %524 = vmatprep.subr.mxu0 0.0
        %525 = vmatpush1.msra.mxu0 0.0
        %526 = vmatprep.subr.mxu0 0.0
        %527 = vmatpush1.msra.mxu0 0.0
        %528 = vmatprep.subr.mxu0 0.0
        %529 = vmatpush1.msra.mxu0 0.0
        %530 = vmatprep.subr.mxu0 0.0
        %531 = vmatpush1.msra.mxu0 0.0
        %532 = vmatprep.subr.mxu0 0.0
        %533 = vmatpush1.msra.mxu0 0.0
        %534 = vmatprep.subr.mxu0 0.0
        %535 = vmatpush1.msra.mxu0 0.0
        %536 = vmatprep.subr.mxu0 0.0
        %537 = vmatpush1.msra.mxu0 0.0
        %538 = vmatprep.subr.mxu0 0.0
        %539 = vmatpush1.msra.mxu0 0.0
        %540 = vmatprep.subr.mxu0 0.0
        %541 = vmatpush1.msra.mxu0 0.0
        %542 = vmatprep.subr.mxu0 0.0
        %543 = vmatpush1.msra.mxu0 0.0
        %544 = vmatprep.subr.mxu0 0.0
        %545 = vmatpush1.msra.mxu0 0.0
        %546 = vmatprep.subr.mxu0 0.0
        %547 = vmatpush1.msra.mxu0 0.0
        %548 = vmatprep.mubr.f32.mxu0 0.0
        %549 = vmatmul.mubr.f32.gmra.mrb[0].mxu0 %v459
        %v550 = vpop.f32.mrb[0].mxu0
        %v551 = vadd.f32 %v482, %v550
        %v552 = vpop.f32.mrb[0].mxu0
        %553 = vmatprep.mubr.f32.mxu0 0.0
        %554 = vmatmul.mubr.f32.gmra.mrb[0].mxu0 %v460
        %v555 = vpop.f32.mrb[0].mxu0
        %v556 = vadd.f32 %v482, %v555
        %v557 = vpop.f32.mrb[0].mxu0
        %558 = vdwg.mxu0
        %v559 = vmul.f32 %v551, 0.5
        %v560 = vmul.f32 %v556, 0.5
        %v561 = vmul.f32 %v551, 0.70710677
        %v562 = vmul.f32 %v556, 0.70710677
        %v563 = verf.f32.pop %v561
        %v564 = verf.f32.pop %v562
        %v565 = vadd.f32 %v563, 1.0
        %v566 = vadd.f32 %v564, 1.0
        %v567 = vmul.f32 %v559, %v565
        %v568 = vmul.f32 %v560, %v566
        %v569 = vld [vmem:[#allocation8] sm:$0xff]
        %v570 = vld [vmem:[#allocation8 + $0x8] sm:$0xff]
        %v571 = vld [vmem:[#allocation8 + $0x10] sm:$0xff]
        %v572 = vld [vmem:[#allocation8 + $0x18] sm:$0xff]
        %v573 = vld [vmem:[#allocation8 + $0x20] sm:$0xff]
        %v574 = vld [vmem:[#allocation8 + $0x28] sm:$0xff]
        %v575 = vld [vmem:[#allocation8 + $0x30] sm:$0xff]
        %v576 = vld [vmem:[#allocation8 + $0x38] sm:$0xff]
        %v577 = vld [vmem:[#allocation8 + $0x40] sm:$0xff]
        %v578 = vld [vmem:[#allocation8 + $0x48] sm:$0xff]
        %v579 = vld [vmem:[#allocation8 + $0x50] sm:$0xff]
        %v580 = vld [vmem:[#allocation8 + $0x58] sm:$0xff]
        %v581 = vld [vmem:[#allocation8 + $0x60] sm:$0xff]
        %v582 = vld [vmem:[#allocation8 + $0x68] sm:$0xff]
        %v583 = vld [vmem:[#allocation8 + $0x70] sm:$0xff]
        %v584 = vld [vmem:[#allocation8 + $0x78] sm:$0xff]
        %v585 = vld [vmem:[#allocation10] sm:$0x1]
        %v587 = vlaneseq
        %v588 = vshrl.u32 %v587, 7
        %v589 = vsub.s32 0, %v588
        %v590 = vrot.slane %v585, %v589
        %592 = vmatprep.subr.mxu0 0.0
        %593 = vmatpush1.msra.mxu0 %v569
        %594 = vmatprep.subr.mxu0 0.0
        %595 = vmatpush1.msra.mxu0 %v570
        %596 = vmatprep.subr.mxu0 0.0
        %597 = vmatpush1.msra.mxu0 %v571
        %598 = vmatprep.subr.mxu0 0.0
        %599 = vmatpush1.msra.mxu0 %v572
        %600 = vmatprep.subr.mxu0 0.0
        %601 = vmatpush1.msra.mxu0 %v573
        %602 = vmatprep.subr.mxu0 0.0
        %603 = vmatpush1.msra.mxu0 %v574
        %604 = vmatprep.subr.mxu0 0.0
        %605 = vmatpush1.msra.mxu0 %v575
        %606 = vmatprep.subr.mxu0 0.0
        %607 = vmatpush1.msra.mxu0 %v576
        %608 = vmatprep.subr.mxu0 0.0
        %609 = vmatpush1.msra.mxu0 %v577
        %610 = vmatprep.subr.mxu0 0.0
        %611 = vmatpush1.msra.mxu0 %v578
        %612 = vmatprep.subr.mxu0 0.0
        %613 = vmatpush1.msra.mxu0 %v579
        %614 = vmatprep.subr.mxu0 0.0
        %615 = vmatpush1.msra.mxu0 %v580
        %616 = vmatprep.subr.mxu0 0.0
        %617 = vmatpush1.msra.mxu0 %v581
        %618 = vmatprep.subr.mxu0 0.0
        %619 = vmatpush1.msra.mxu0 %v582
        %620 = vmatprep.subr.mxu0 0.0
        %621 = vmatpush1.msra.mxu0 %v583
        %622 = vmatprep.subr.mxu0 0.0
        %623 = vmatpush1.msra.mxu0 %v584
        %624 = vmatprep.subr.mxu0 0.0
        %625 = vmatpush1.msra.mxu0 0.0
        %626 = vmatprep.subr.mxu0 0.0
        %627 = vmatpush1.msra.mxu0 0.0
        %628 = vmatprep.subr.mxu0 0.0
        %629 = vmatpush1.msra.mxu0 0.0
        %630 = vmatprep.subr.mxu0 0.0
        %631 = vmatpush1.msra.mxu0 0.0
        %632 = vmatprep.subr.mxu0 0.0
        %633 = vmatpush1.msra.mxu0 0.0
        %634 = vmatprep.subr.mxu0 0.0
        %635 = vmatpush1.msra.mxu0 0.0
        %636 = vmatprep.subr.mxu0 0.0
        %637 = vmatpush1.msra.mxu0 0.0
        %638 = vmatprep.subr.mxu0 0.0
        %639 = vmatpush1.msra.mxu0 0.0
        %640 = vmatprep.subr.mxu0 0.0
        %641 = vmatpush1.msra.mxu0 0.0
        %642 = vmatprep.subr.mxu0 0.0
        %643 = vmatpush1.msra.mxu0 0.0
        %644 = vmatprep.subr.mxu0 0.0
        %645 = vmatpush1.msra.mxu0 0.0
        %646 = vmatprep.subr.mxu0 0.0
        %647 = vmatpush1.msra.mxu0 0.0
        %648 = vmatprep.subr.mxu0 0.0
        %649 = vmatpush1.msra.mxu0 0.0
        %650 = vmatprep.subr.mxu0 0.0
        %651 = vmatpush1.msra.mxu0 0.0
        %652 = vmatprep.subr.mxu0 0.0
        %653 = vmatpush1.msra.mxu0 0.0
        %654 = vmatprep.subr.mxu0 0.0
        %655 = vmatpush1.msra.mxu0 0.0
        %656 = vmatprep.mubr.f32.mxu0 0.0
        %657 = vmatmul.mubr.f32.gmra.mrb[0].mxu0 %v567
        %v658 = vpop.f32.mrb[0].mxu0
        %v659 = vadd.f32 %v590, %v658
        %v660 = vpop.f32.mrb[0].mxu0
        %661 = vmatprep.mubr.f32.mxu0 0.0
        %662 = vmatmul.mubr.f32.gmra.mrb[0].mxu0 %v568
        %v663 = vpop.f32.mrb[0].mxu0
        %v664 = vadd.f32 %v590, %v663
        %v665 = vpop.f32.mrb[0].mxu0
        %666 = vdwg.mxu0
        %v667 = vmul.f32 %v659, 0.5
        %v668 = vmul.f32 %v664, 0.5
        %v669 = vmul.f32 %v659, 0.70710677
        %v670 = vmul.f32 %v664, 0.70710677
        %v671 = verf.f32.pop %v669
        %v672 = verf.f32.pop %v670
        %v673 = vadd.f32 %v671, 1.0
        %v674 = vadd.f32 %v672, 1.0
        %v675 = vmul.f32 %v667, %v673
        %v676 = vmul.f32 %v668, %v674
        %v677 = vld [vmem:[#allocation11] sm:$0xff]
        %v678 = vld [vmem:[#allocation11 + $0x8] sm:$0xff]
        %v679 = vld [vmem:[#allocation11 + $0x10] sm:$0xff]
        %v680 = vld [vmem:[#allocation11 + $0x18] sm:$0xff]
        %v681 = vld [vmem:[#allocation11 + $0x20] sm:$0xff]
        %v682 = vld [vmem:[#allocation11 + $0x28] sm:$0xff]
        %v683 = vld [vmem:[#allocation11 + $0x30] sm:$0xff]
        %v684 = vld [vmem:[#allocation11 + $0x38] sm:$0xff]
        %v685 = vld [vmem:[#allocation11 + $0x40] sm:$0xff]
        %v686 = vld [vmem:[#allocation11 + $0x48] sm:$0xff]
        %v687 = vld [vmem:[#allocation11 + $0x50] sm:$0xff]
        %v688 = vld [vmem:[#allocation11 + $0x58] sm:$0xff]
        %v689 = vld [vmem:[#allocation11 + $0x60] sm:$0xff]
        %v690 = vld [vmem:[#allocation11 + $0x68] sm:$0xff]
        %v691 = vld [vmem:[#allocation11 + $0x70] sm:$0xff]
        %v692 = vld [vmem:[#allocation11 + $0x78] sm:$0xff]
        %v693 = vld [vmem:[#allocation13] sm:$0x1]
        %v695 = vlaneseq
        %v696 = vshrl.u32 %v695, 7
        %v697 = vsub.s32 0, %v696
        %v698 = vrot.slane %v693, %v697
        %700 = vmatprep.subr.mxu0 0.0
        %701 = vmatpush1.msra.mxu0 %v677
        %702 = vmatprep.subr.mxu0 0.0
        %703 = vmatpush1.msra.mxu0 %v678
        %704 = vmatprep.subr.mxu0 0.0
        %705 = vmatpush1.msra.mxu0 %v679
        %706 = vmatprep.subr.mxu0 0.0
        %707 = vmatpush1.msra.mxu0 %v680
        %708 = vmatprep.subr.mxu0 0.0
        %709 = vmatpush1.msra.mxu0 %v681
        %710 = vmatprep.subr.mxu0 0.0
        %711 = vmatpush1.msra.mxu0 %v682
        %712 = vmatprep.subr.mxu0 0.0
        %713 = vmatpush1.msra.mxu0 %v683
        %714 = vmatprep.subr.mxu0 0.0
        %715 = vmatpush1.msra.mxu0 %v684
        %716 = vmatprep.subr.mxu0 0.0
        %717 = vmatpush1.msra.mxu0 %v685
        %718 = vmatprep.subr.mxu0 0.0
        %719 = vmatpush1.msra.mxu0 %v686
        %720 = vmatprep.subr.mxu0 0.0
        %721 = vmatpush1.msra.mxu0 %v687
        %722 = vmatprep.subr.mxu0 0.0
        %723 = vmatpush1.msra.mxu0 %v688
        %724 = vmatprep.subr.mxu0 0.0
        %725 = vmatpush1.msra.mxu0 %v689
        %726 = vmatprep.subr.mxu0 0.0
        %727 = vmatpush1.msra.mxu0 %v690
        %728 = vmatprep.subr.mxu0 0.0
        %729 = vmatpush1.msra.mxu0 %v691
        %730 = vmatprep.subr.mxu0 0.0
        %731 = vmatpush1.msra.mxu0 %v692
        %732 = vmatprep.subr.mxu0 0.0
        %733 = vmatpush1.msra.mxu0 0.0
        %734 = vmatprep.subr.mxu0 0.0
        %735 = vmatpush1.msra.mxu0 0.0
        %736 = vmatprep.subr.mxu0 0.0
        %737 = vmatpush1.msra.mxu0 0.0
        %738 = vmatprep.subr.mxu0 0.0
        %739 = vmatpush1.msra.mxu0 0.0
        %740 = vmatprep.subr.mxu0 0.0
        %741 = vmatpush1.msra.mxu0 0.0
        %742 = vmatprep.subr.mxu0 0.0
        %743 = vmatpush1.msra.mxu0 0.0
        %744 = vmatprep.subr.mxu0 0.0
        %745 = vmatpush1.msra.mxu0 0.0
        %746 = vmatprep.subr.mxu0 0.0
        %747 = vmatpush1.msra.mxu0 0.0
        %748 = vmatprep.subr.mxu0 0.0
        %749 = vmatpush1.msra.mxu0 0.0
        %750 = vmatprep.subr.mxu0 0.0
        %751 = vmatpush1.msra.mxu0 0.0
        %752 = vmatprep.subr.mxu0 0.0
        %753 = vmatpush1.msra.mxu0 0.0
        %754 = vmatprep.subr.mxu0 0.0
        %755 = vmatpush1.msra.mxu0 0.0
        %756 = vmatprep.subr.mxu0 0.0
        %757 = vmatpush1.msra.mxu0 0.0
        %758 = vmatprep.subr.mxu0 0.0
        %759 = vmatpush1.msra.mxu0 0.0
        %760 = vmatprep.subr.mxu0 0.0
        %761 = vmatpush1.msra.mxu0 0.0
        %762 = vmatprep.subr.mxu0 0.0
        %763 = vmatpush1.msra.mxu0 0.0
        %764 = vmatprep.mubr.f32.mxu0 0.0
        %765 = vmatmul.mubr.f32.gmra.mrb[0].mxu0 %v675
        %v766 = vpop.f32.mrb[0].mxu0
        %v767 = vadd.f32 %v698, %v766
        %v768 = vpop.f32.mrb[0].mxu0
        %769 = vmatprep.mubr.f32.mxu0 0.0
        %770 = vmatmul.mubr.f32.gmra.mrb[0].mxu0 %v676
        %v771 = vpop.f32.mrb[0].mxu0
        %v772 = vadd.f32 %v698, %v771
        %v773 = vpop.f32.mrb[0].mxu0
        %774 = vdwg.mxu0
        %v775 = vadd.f32 %v767, %v459
        %v776 = vadd.f32 %v772, %v460
        %777 = vadd.xlane.f32.xlu0 %v775
        %v778 = vpop.xlane.xlu0 %777
        %779 = vadd.xlane.f32.xlu0 %v776
        %v780 = vpop.xlane.xlu0 %779
        %v781 = vmul.f32 %v778, 0.03125
        %v782 = vmul.f32 %v780, 0.03125
        %v783 = vlaneseq
        %v784 = vand.u32 %v783, 127
        %vm785 = vcmp.lt.s32.totalorder %v784, 32
        %v786 = vsub.f32 %v775, %v781
        %v787 = vsub.f32 %v776, %v782
        %v788 = vsel %vm785, %v786, 0.0
        %v789 = vsel %vm785, %v787, 0.0
        %v790 = vmul.f32 %v788, %v788
        %v791 = vmul.f32 %v789, %v789
        %792 = vadd.xlane.f32.xlu0 %v790
        %v793 = vpop.xlane.xlu0 %792
        %794 = vadd.xlane.f32.xlu0 %v791
        %v795 = vpop.xlane.xlu0 %794
        %v796 = vmul.f32 %v793, 0.03125
        %v797 = vmul.f32 %v795, 0.03125
        %v798 = vadd.f32 %v796, 1e-05
        %v799 = vadd.f32 %v797, 1e-05
        %v800 = vrsqrt.pop %v798
        %v801 = vrsqrt.pop %v799
        %v802 = vmul.f32 %v788, %v800
        %v803 = vmul.f32 %v789, %v801
        %v804 = vld [vmem:[#allocation14] sm:$0x1]
        %v806 = vlaneseq
        %v807 = vshrl.u32 %v806, 7
        %v808 = vsub.s32 0, %v807
        %v809 = vrot.slane %v804, %v808
        %v811 = vmul.f32 %v802, %v809
        %v812 = vmul.f32 %v803, %v809
        %v813 = vld [vmem:[#allocation16] sm:$0x1]
        %v815 = vlaneseq
        %v816 = vshrl.u32 %v815, 7
        %v817 = vsub.s32 0, %v816
        %v818 = vrot.slane %v813, %v817
        %v820 = vadd.f32 %v811, %v818
        %v821 = vadd.f32 %v812, %v818
        %822 = vst [vmem:[%s456] sm:$0xff] %v820
        %823 = vst [vmem:[%s456 + $0x8] sm:$0xff] %v821
        %s824 = sand.u32 %s232, 1
        %s825 = scalar_lea.sflag [#allocation4], %s824
        %s826 = sand.u32 %s232, 1
        %s827 = smul.addr %s826, 16
        %s828 = scalar_lea.vmem [#allocation17], %s827
        // Predicated region
        $region93: #{tpu_custom_call.1} parent=55 // pred_check
          %p829 = pneg %p242
        $region94: #{tpu_custom_call.1} parent=55 // pred_check_branch
          %831 = sbr.rel (%p829) target = $region96
        $region95: #{tpu_custom_call.1} parent=55 // pred_region
          %s832 = smul.u32 2, %s30
          %s834 = ssub.s32 256, 256
          %835 = vsyncadd %s825, %s834
          %s836 = smul.addr %s832, 128
          %s837 = scalar_lea.hbm %s9, %s836
          %s838 = sshll.u32 %s828, 4
          %s839 = int_to_ptr.vmem [resolvable:$true] %s838
          %844 = dma.vmem_to_hbm [thread:$0]  %s839, 256, %s837, %s825, 128, 128, 8
        $region96: #{tpu_custom_call.1} parent=55 // pred_fallthru
          _
      $region56: #{tpu_custom_call.1} parent=5 // pred_fallthru
        _
      %p845 = scmp.le.s32.totalorder 2, %s25
      // Predicated region
      $region97: #{tpu_custom_call.1} parent=5 // pred_check
        %p846 = pneg %p845
      $region98: #{tpu_custom_call.1} parent=5 // pred_check_branch
        %848 = sbr.rel (%p846) target = $region100
      $region99: #{tpu_custom_call.1} parent=5 // pred_region
        %s849 = ssub.s32 %s25, 2
        // Predicated region
        $region101: #{tpu_custom_call.1} parent=99 // pred_check
          %p850 = pneg %p248
        $region102: #{tpu_custom_call.1} parent=99 // pred_check_branch
          %852 = sbr.rel (%p850) target = $region104
        $region103: #{tpu_custom_call.1} parent=99 // pred_region
          %s853 = sand.u32 %s233, 1
          %s854 = scalar_lea.sflag [#allocation4], %s853
          %s855 = sand.u32 %s233, 1
          %s856 = smul.addr %s855, 16
          %s857 = scalar_lea.vmem [#allocation17], %s856
          %858 = dma.done %s854, 256
        $region104: #{tpu_custom_call.1} parent=99 // pred_fallthru
          _
      $region100: #{tpu_custom_call.1} parent=5 // pred_fallthru
        _
    $region6: #{tpu_custom_call.1} parent=1 // loop_footer
      %s29 = sadd.s32 1, %s25
    $region7: #{tpu_custom_call.1} parent=1 // loop_footer_branch
      %24 = sbr.rel target = $region3
    $region8: #{tpu_custom_call.1} parent=1 // loop_exit
      _
    %859 = vsyncpa [#allocation3], 1
    %s860 = scalar_lea.sflag [#allocation3], 1
    %861 = vsyncpa %s860, 1
    %862 = vsyncpa [#allocation6], 1
    %863 = vsyncpa [#allocation9], 1
    %864 = vsyncpa [#allocation12], 1
    %865 = vsyncpa [#allocation15], 1
    %866 = vsyncpa [#allocation4], 1
    %s867 = scalar_lea.sflag [#allocation4], 1
    %868 = vsyncpa %s867, 1

// kernel: tpu_custom_call.1
$region0: #{tpu_custom_call.1}
  #allocation0 [shape = 'u32[]', space=smem, size = 0x4, offset = 0x4, fixed_abs, tag = 'smem constant byte address 0x4 - core index']
  #allocation1 [shape = 'u32[144,128]{1,0:T(1,128)}', space=vmem, size = 0x12000, scoped, tag = 'internal scratch']
  %s0 = inlined_call_operand.hbm [shape: f32[48,128], index: 0, kind: input, shape index: {}]
  %s1 = inlined_call_operand.hbm [shape: f32[128,128], index: 1, kind: input, shape index: {}]
  %s2 = inlined_call_operand.hbm [shape: f32[1,128], index: 2, kind: input, shape index: {}]
  %s3 = inlined_call_operand.hbm [shape: f32[128,128], index: 3, kind: input, shape index: {}]
  %s4 = inlined_call_operand.hbm [shape: f32[1,128], index: 4, kind: input, shape index: {}]
  %s5 = inlined_call_operand.hbm [shape: f32[128,128], index: 5, kind: input, shape index: {}]
  %s6 = inlined_call_operand.hbm [shape: f32[1,128], index: 6, kind: input, shape index: {}]
  %s7 = inlined_call_operand.hbm [shape: f32[1,128], index: 7, kind: input, shape index: {}]
  %s8 = inlined_call_operand.hbm [shape: f32[1,128], index: 8, kind: input, shape index: {}]
  %s9 = inlined_call_operand.hbm [shape: f32[48,128], index: 9, kind: output, shape index: {}]
  %s10 = sld [smem:[#allocation0]]
  $region105: #{tpu_custom_call.1} parent=0
    _
  %s12 = ssub.s32 1, %s10
  %s13 = scalar_select 0, %s12, %s10
  $region1: #{tpu_custom_call.1} parent=0
    #allocation2 [shape = 'u8[16384]{0}', space=vmem, size = 0x4000, scoped, tag = 'input window, operand 0']
    #allocation3 [shape = 's32[2]{0}', space=sflag, size = 0x8, scoped, tag = 'scoped memory for tpu_custom_call.1']
    #allocation4 [shape = 's32[2]{0}', space=sflag, size = 0x8, scoped, tag = 'scoped memory for tpu_custom_call.1']
    #allocation5 [shape = 'u8[65536]{0}', space=vmem, size = 0x10000, scoped, tag = 'input window, operand 1, single buffered']
    #allocation6 [shape = 's32[1]{0}', space=sflag, size = 0x4, scoped, tag = 'scoped memory for tpu_custom_call.1']
    #allocation7 [shape = 'u8[512]{0}', space=vmem, size = 0x400, scoped, tag = 'input window, operand 2, single buffered']
    #allocation8 [shape = 'u8[65536]{0}', space=vmem, size = 0x10000, scoped, tag = 'input window, operand 3, single buffered']
    #allocation9 [shape = 's32[1]{0}', space=sflag, size = 0x4, scoped, tag = 'scoped memory for tpu_custom_call.1']
    #allocation10 [shape = 'u8[512]{0}', space=vmem, size = 0x400, scoped, tag = 'input window, operand 4, single buffered']
    #allocation11 [shape = 'u8[65536]{0}', space=vmem, size = 0x10000, scoped, tag = 'input window, operand 5, single buffered']
    #allocation12 [shape = 's32[1]{0}', space=sflag, size = 0x4, scoped, tag = 'scoped memory for tpu_custom_call.1']
    #allocation13 [shape = 'u8[512]{0}', space=vmem, size = 0x400, scoped, tag = 'input window, operand 6, single buffered']
    #allocation14 [shape = 'u8[512]{0}', space=vmem, size = 0x400, scoped, tag = 'input window, operand 7, single buffered']
    #allocation15 [shape = 's32[1]{0}', space=sflag, size = 0x4, scoped, tag = 'scoped memory for tpu_custom_call.1']
    #allocation16 [shape = 'u8[512]{0}', space=vmem, size = 0x400, scoped, tag = 'input window, operand 8, single buffered']
    #allocation17 [shape = 'u8[16384]{0}', space=vmem, size = 0x4000, scoped, tag = 'output window, operand 0']
    %14 = vsyncpa [#allocation3], 0
    %s15 = scalar_lea.sflag [#allocation3], 1
    %16 = vsyncpa %s15, 0
    %17 = vsyncpa [#allocation6], 0
    %18 = vsyncpa [#allocation9], 0
    %19 = vsyncpa [#allocation12], 0
    %20 = vsyncpa [#allocation15], 0
    %21 = vsyncpa [#allocation4], 0
    %s22 = scalar_lea.sflag [#allocation4], 1
    %23 = vsyncpa %s22, 0
    loop: start=0, step=1, limit=5
    $region2: #{tpu_custom_call.1} parent=1 // loop_pre_header
      _
    $region3: #{tpu_custom_call.1} parent=1 // loop_header
      %s25 = sphi 0, %s29
      %p26 = scmp.ge.s32.totalorder %s25, 5
      %s35 = sphi 0, %s37
      %s38 = sphi 0, %s35
      %s39 = sphi 0, %s38
      %s55 = sphi 0, %s39
      %s59 = sphi 0, %s59
      %s61 = sphi 0, %s59
      %s62 = sphi 0, %s61
      %s76 = sphi 0, %s62
      %s80 = sphi 0, %s80
      %s82 = sphi 0, %s80
      %s83 = sphi 0, %s82
      %s97 = sphi 0, %s83
      %s101 = sphi 0, %s101
      %s103 = sphi 0, %s101
      %s104 = sphi 0, %s103
      %s118 = sphi 0, %s104
      %s122 = sphi 0, %s122
      %s124 = sphi 0, %s122
      %s125 = sphi 0, %s124
      %s139 = sphi 0, %s125
      %s143 = sphi 0, %s143
      %s145 = sphi 0, %s143
      %s146 = sphi 0, %s145
      %s160 = sphi 0, %s146
      %s164 = sphi 0, %s164
      %s166 = sphi 0, %s164
      %s167 = sphi 0, %s166
      %s181 = sphi 0, %s167
      %s185 = sphi 0, %s185
      %s187 = sphi 0, %s185
      %s188 = sphi 0, %s187
      %s202 = sphi 0, %s188
      %s206 = sphi 0, %s206
      %s208 = sphi 0, %s206
      %s209 = sphi 0, %s208
      %s223 = sphi 0, %s209
      %s229 = sphi 0, %s231
      %s232 = sphi 0, %s229
      %s233 = sphi 0, %s232
      %s249 = sphi 0, %s233
    $region4: #{tpu_custom_call.1} parent=1 // loop_header_branch
      %28 = sbr.rel (%p26) target = $region8
    $region5: #{tpu_custom_call.1} parent=1 // loop_body
      %s30 = ssub.s32 %s25, 1
      %s31 = ssub.s32 %s25, 2
      %s32 = sadd.s32 %s25, 1
      %s33 = ssub.s32 %s25, %s32
      %p34 = scmp.eq.s32.totalorder %s33, 0
      %s36 = sadd.s32 %s35, 1
      %s37 = scalar_select %p34, %s35, %s36
      %p40 = pneg %p34
      %p41 = scmp.eq.s32.totalorder %s25, 2
      %p42 = por %p40, %p41
      %p43 = scmp.ne.s32.totalorder %s35, %s38
      %p44 = scmp.eq.s32.totalorder %s25, 0
      %p45 = por %p43, %p44
      %p46 = scmp.ne.s32.totalorder %s35, %s38
      %p47 = scmp.eq.s32.totalorder %s30, 2
      %p48 = por %p46, %p47
      %p49 = scmp.ne.s32.totalorder %s38, %s39
      %p50 = scmp.eq.s32.totalorder %s30, 0
      %p51 = por %p49, %p50
      %p52 = scmp.ne.s32.totalorder %s38, %s39
      %p53 = scmp.eq.s32.totalorder %s31, 2
      %p54 = por %p52, %p53
      %p56 = scmp.ne.s32.totalorder %s39, %s55
      %p57 = scmp.eq.s32.totalorder %s31, 0
      %p58 = por %p56, %p57
      %s60 = sadd.s32 %s59, 1
      %p63 = scmp.eq.s32.totalorder %s25, 2
      %p64 = scmp.ne.s32.totalorder %s59, %s61
      %p65 = scmp.eq.s32.totalorder %s25, 0
      %p66 = por %p64, %p65
      %p67 = scmp.ne.s32.totalorder %s59, %s61
      %p68 = scmp.eq.s32.totalorder %s30, 2
      %p69 = por %p67, %p68
      %p70 = scmp.ne.s32.totalorder %s61, %s62
      %p71 = scmp.eq.s32.totalorder %s30, 0
      %p72 = por %p70, %p71
      %p73 = scmp.ne.s32.totalorder %s61, %s62
      %p74 = scmp.eq.s32.totalorder %s31, 2
      %p75 = por %p73, %p74
      %p77 = scmp.ne.s32.totalorder %s62, %s76
      %p78 = scmp.eq.s32.totalorder %s31, 0
      %p79 = por %p77, %p78
      %s81 = sadd.s32 %s80, 1
      %p84 = scmp.eq.s32.totalorder %s25, 2
      %p85 = scmp.ne.s32.totalorder %s80, %s82
      %p86 = scmp.eq.s32.totalorder %s25, 0
      %p87 = por %p85, %p86
      %p88 = scmp.ne.s32.totalorder %s80, %s82
      %p89 = scmp.eq.s32.totalorder %s30, 2
      %p90 = por %p88, %p89
      %p91 = scmp.ne.s32.totalorder %s82, %s83
      %p92 = scmp.eq.s32.totalorder %s30, 0
      %p93 = por %p91, %p92
      %p94 = scmp.ne.s32.totalorder %s82, %s83
      %p95 = scmp.eq.s32.totalorder %s31, 2
      %p96 = por %p94, %p95
      %p98 = scmp.ne.s32.totalorder %s83, %s97
      %p99 = scmp.eq.s32.totalorder %s31, 0
      %p100 = por %p98, %p99
      %s102 = sadd.s32 %s101, 1
      %p105 = scmp.eq.s32.totalorder %s25, 2
      %p106 = scmp.ne.s32.totalorder %s101, %s103
      %p107 = scmp.eq.s32.totalorder %s25, 0
      %p108 = por %p106, %p107
      %p109 = scmp.ne.s32.totalorder %s101, %s103
      %p110 = scmp.eq.s32.totalorder %s30, 2
      %p111 = por %p109, %p110
      %p112 = scmp.ne.s32.totalorder %s103, %s104
      %p113 = scmp.eq.s32.totalorder %s30, 0
      %p114 = por %p112, %p113
      %p115 = scmp.ne.s32.totalorder %s103, %s104
      %p116 = scmp.eq.s32.totalorder %s31, 2
      %p117 = por %p115, %p116
      %p119 = scmp.ne.s32.totalorder %s104, %s118
      %p120 = scmp.eq.s32.totalorder %s31, 0
      %p121 = por %p119, %p120
      %s123 = sadd.s32 %s122, 1
      %p126 = scmp.eq.s32.totalorder %s25, 2
      %p127 = scmp.ne.s32.totalorder %s122, %s124
      %p128 = scmp.eq.s32.totalorder %s25, 0
      %p129 = por %p127, %p128
      %p130 = scmp.ne.s32.totalorder %s122, %s124
      %p131 = scmp.eq.s32.totalorder %s30, 2
      %p132 = por %p130, %p131
      %p133 = scmp.ne.s32.totalorder %s124, %s125
      %p134 = scmp.eq.s32.totalorder %s30, 0
      %p135 = por %p133, %p134
      %p136 = scmp.ne.s32.totalorder %s124, %s125
      %p137 = scmp.eq.s32.totalorder %s31, 2
      %p138 = por %p136, %p137
      %p140 = scmp.ne.s32.totalorder %s125, %s139
      %p141 = scmp.eq.s32.totalorder %s31, 0
      %p142 = por %p140, %p141
      %s144 = sadd.s32 %s143, 1
      %p147 = scmp.eq.s32.totalorder %s25, 2
      %p148 = scmp.ne.s32.totalorder %s143, %s145
      %p149 = scmp.eq.s32.totalorder %s25, 0
      %p150 = por %p148, %p149
      %p151 = scmp.ne.s32.totalorder %s143, %s145
      %p152 = scmp.eq.s32.totalorder %s30, 2
      %p153 = por %p151, %p152
      %p154 = scmp.ne.s32.totalorder %s145, %s146
      %p155 = scmp.eq.s32.totalorder %s30, 0
      %p156 = por %p154, %p155
      %p157 = scmp.ne.s32.totalorder %s145, %s146
      %p158 = scmp.eq.s32.totalorder %s31, 2
      %p159 = por %p157, %p158
      %p161 = scmp.ne.s32.totalorder %s146, %s160
      %p162 = scmp.eq.s32.totalorder %s31, 0
      %p163 = por %p161, %p162
      %s165 = sadd.s32 %s164, 1
      %p168 = scmp.eq.s32.totalorder %s25, 2
      %p169 = scmp.ne.s32.totalorder %s164, %s166
      %p170 = scmp.eq.s32.totalorder %s25, 0
      %p171 = por %p169, %p170
      %p172 = scmp.ne.s32.totalorder %s164, %s166
      %p173 = scmp.eq.s32.totalorder %s30, 2
      %p174 = por %p172, %p173
      %p175 = scmp.ne.s32.totalorder %s166, %s167
      %p176 = scmp.eq.s32.totalorder %s30, 0
      %p177 = por %p175, %p176
      %p178 = scmp.ne.s32.totalorder %s166, %s167
      %p179 = scmp.eq.s32.totalorder %s31, 2
      %p180 = por %p178, %p179
      %p182 = scmp.ne.s32.totalorder %s167, %s181
      %p183 = scmp.eq.s32.totalorder %s31, 0
      %p184 = por %p182, %p183
      %s186 = sadd.s32 %s185, 1
      %p189 = scmp.eq.s32.totalorder %s25, 2
      %p190 = scmp.ne.s32.totalorder %s185, %s187
      %p191 = scmp.eq.s32.totalorder %s25, 0
      %p192 = por %p190, %p191
      %p193 = scmp.ne.s32.totalorder %s185, %s187
      %p194 = scmp.eq.s32.totalorder %s30, 2
      %p195 = por %p193, %p194
      %p196 = scmp.ne.s32.totalorder %s187, %s188
      %p197 = scmp.eq.s32.totalorder %s30, 0
      %p198 = por %p196, %p197
      %p199 = scmp.ne.s32.totalorder %s187, %s188
      %p200 = scmp.eq.s32.totalorder %s31, 2
      %p201 = por %p199, %p200
      %p203 = scmp.ne.s32.totalorder %s188, %s202
      %p204 = scmp.eq.s32.totalorder %s31, 0
      %p205 = por %p203, %p204
      %s207 = sadd.s32 %s206, 1
      %p210 = scmp.eq.s32.totalorder %s25, 2
      %p211 = scmp.ne.s32.totalorder %s206, %s208
      %p212 = scmp.eq.s32.totalorder %s25, 0
      %p213 = por %p211, %p212
      %p214 = scmp.ne.s32.totalorder %s206, %s208
      %p215 = scmp.eq.s32.totalorder %s30, 2
      %p216 = por %p214, %p215
      %p217 = scmp.ne.s32.totalorder %s208, %s209
      %p218 = scmp.eq.s32.totalorder %s30, 0
      %p219 = por %p217, %p218
      %p220 = scmp.ne.s32.totalorder %s208, %s209
      %p221 = scmp.eq.s32.totalorder %s31, 2
      %p222 = por %p220, %p221
      %p224 = scmp.ne.s32.totalorder %s209, %s223
      %p225 = scmp.eq.s32.totalorder %s31, 0
      %p226 = por %p224, %p225
      %s227 = ssub.s32 %s25, %s32
      %p228 = scmp.eq.s32.totalorder %s227, 0
      %s230 = sadd.s32 %s229, 1
      %s231 = scalar_select %p228, %s229, %s230
      %p234 = pneg %p228
      %p235 = scmp.eq.s32.totalorder %s25, 2
      %p236 = por %p234, %p235
      %p237 = scmp.ne.s32.totalorder %s229, %s232
      %p238 = scmp.eq.s32.totalorder %s25, 0
      %p239 = por %p237, %p238
      %p240 = scmp.ne.s32.totalorder %s229, %s232
      %p241 = scmp.eq.s32.totalorder %s30, 2
      %p242 = por %p240, %p241
      %p243 = scmp.ne.s32.totalorder %s232, %s233
      %p244 = scmp.eq.s32.totalorder %s30, 0
      %p245 = por %p243, %p244
      %p246 = scmp.ne.s32.totalorder %s232, %s233
      %p247 = scmp.eq.s32.totalorder %s31, 2
      %p248 = por %p246, %p247
      %p250 = scmp.ne.s32.totalorder %s233, %s249
      %p251 = scmp.eq.s32.totalorder %s31, 0
      %p252 = por %p250, %p251
      %p253 = scmp.le.s32.totalorder 1, %s25
      %p254 = scmp.lt.s32.totalorder %s25, 4
      %p255 = pnand %p253, %p254
      %p256 = pneg %p255
      // Predicated region
      $region9: #{tpu_custom_call.1} parent=5 // pred_check
        _
      $region10: #{tpu_custom_call.1} parent=5 // pred_check_branch
        %258 = sbr.rel (%p255) target = $region12
      $region11: #{tpu_custom_call.1} parent=5 // pred_region
        %s259 = ssub.s32 %s25, 1
        // Predicated region
        $region13: #{tpu_custom_call.1} parent=11 // pred_check
          %p260 = pneg %p72
        $region14: #{tpu_custom_call.1} parent=11 // pred_check_branch
          %262 = sbr.rel (%p260) target = $region16
        $region15: #{tpu_custom_call.1} parent=11 // pred_region
          %s264 = ssub.s32 2048, 2048
          %265 = vsyncadd [#allocation6], %s264
          %s266 = sshll.u32 [#allocation5], 4
          %s267 = int_to_ptr.vmem [resolvable:$true] %s266
          %272 = dma.hbm_to_vmem [thread:$0]  %s1, 2048, %s267, [#allocation6], 128, 128, 8
        $region16: #{tpu_custom_call.1} parent=11 // pred_fallthru
          _
        // Predicated region
        $region17: #{tpu_custom_call.1} parent=11 // pred_check
          %p273 = pneg %p93
        $region18: #{tpu_custom_call.1} parent=11 // pred_check_branch
          %275 = sbr.rel (%p273) target = $region20
        $region19: #{tpu_custom_call.1} parent=11 // pred_region
          %s277 = ssub.s32 16, 16
          %278 = vsyncadd [#allocation6], %s277
          %s280 = sshll.u32 [#allocation7], 4
          %s281 = int_to_ptr.vmem [resolvable:$true] %s280
          %283 = dma.hbm_to_vmem [thread:$0]  %s2, 16, %s281, [#allocation6]
        $region20: #{tpu_custom_call.1} parent=11 // pred_fallthru
          _
        // Predicated region
        $region21: #{tpu_custom_call.1} parent=11 // pred_check
          %p284 = pneg %p114
        $region22: #{tpu_custom_call.1} parent=11 // pred_check_branch
          %286 = sbr.rel (%p284) target = $region24
        $region23: #{tpu_custom_call.1} parent=11 // pred_region
          %s288 = ssub.s32 2048, 2048
          %289 = vsyncadd [#allocation9], %s288
          %s290 = sshll.u32 [#allocation8], 4
          %s291 = int_to_ptr.vmem [resolvable:$true] %s290
          %296 = dma.hbm_to_vmem [thread:$0]  %s3, 2048, %s291, [#allocation9], 128, 128, 8
        $region24: #{tpu_custom_call.1} parent=11 // pred_fallthru
          _
        // Predicated region
        $region25: #{tpu_custom_call.1} parent=11 // pred_check
          %p297 = pneg %p135
        $region26: #{tpu_custom_call.1} parent=11 // pred_check_branch
          %299 = sbr.rel (%p297) target = $region28
        $region27: #{tpu_custom_call.1} parent=11 // pred_region
          %s301 = ssub.s32 16, 16
          %302 = vsyncadd [#allocation9], %s301
          %s304 = sshll.u32 [#allocation10], 4
          %s305 = int_to_ptr.vmem [resolvable:$true] %s304
          %307 = dma.hbm_to_vmem [thread:$0]  %s4, 16, %s305, [#allocation9]
        $region28: #{tpu_custom_call.1} parent=11 // pred_fallthru
          _
        // Predicated region
        $region29: #{tpu_custom_call.1} parent=11 // pred_check
          %p308 = pneg %p156
        $region30: #{tpu_custom_call.1} parent=11 // pred_check_branch
          %310 = sbr.rel (%p308) target = $region32
        $region31: #{tpu_custom_call.1} parent=11 // pred_region
          %s312 = ssub.s32 2048, 2048
          %313 = vsyncadd [#allocation12], %s312
          %s314 = sshll.u32 [#allocation11], 4
          %s315 = int_to_ptr.vmem [resolvable:$true] %s314
          %320 = dma.hbm_to_vmem [thread:$0]  %s5, 2048, %s315, [#allocation12], 128, 128, 8
        $region32: #{tpu_custom_call.1} parent=11 // pred_fallthru
          _
        // Predicated region
        $region33: #{tpu_custom_call.1} parent=11 // pred_check
          %p321 = pneg %p177
        $region34: #{tpu_custom_call.1} parent=11 // pred_check_branch
          %323 = sbr.rel (%p321) target = $region36
        $region35: #{tpu_custom_call.1} parent=11 // pred_region
          %s325 = ssub.s32 16, 16
          %326 = vsyncadd [#allocation12], %s325
          %s328 = sshll.u32 [#allocation13], 4
          %s329 = int_to_ptr.vmem [resolvable:$true] %s328
          %331 = dma.hbm_to_vmem [thread:$0]  %s6, 16, %s329, [#allocation12]
        $region36: #{tpu_custom_call.1} parent=11 // pred_fallthru
          _
        // Predicated region
        $region37: #{tpu_custom_call.1} parent=11 // pred_check
          %p332 = pneg %p198
        $region38: #{tpu_custom_call.1} parent=11 // pred_check_branch
          %334 = sbr.rel (%p332) target = $region40
        $region39: #{tpu_custom_call.1} parent=11 // pred_region
          %s336 = ssub.s32 16, 16
          %337 = vsyncadd [#allocation15], %s336
          %s339 = sshll.u32 [#allocation14], 4
          %s340 = int_to_ptr.vmem [resolvable:$true] %s339
          %342 = dma.hbm_to_vmem [thread:$0]  %s7, 16, %s340, [#allocation15]
        $region40: #{tpu_custom_call.1} parent=11 // pred_fallthru
          _
        // Predicated region
        $region41: #{tpu_custom_call.1} parent=11 // pred_check
          %p343 = pneg %p219
        $region42: #{tpu_custom_call.1} parent=11 // pred_check_branch
          %345 = sbr.rel (%p343) target = $region44
        $region43: #{tpu_custom_call.1} parent=11 // pred_region
          %s347 = ssub.s32 16, 16
          %348 = vsyncadd [#allocation15], %s347
          %s350 = sshll.u32 [#allocation16], 4
          %s351 = int_to_ptr.vmem [resolvable:$true] %s350
          %353 = dma.hbm_to_vmem [thread:$0]  %s8, 16, %s351, [#allocation15]
        $region44: #{tpu_custom_call.1} parent=11 // pred_fallthru
          _
      $region12: #{tpu_custom_call.1} parent=5 // pred_fallthru
        _
      %p354 = scmp.lt.s32.totalorder %s25, 3
      // Predicated region
      $region45: #{tpu_custom_call.1} parent=5 // pred_check
        %p355 = pneg %p354
      $region46: #{tpu_custom_call.1} parent=5 // pred_check_branch
        %357 = sbr.rel (%p355) target = $region48
      $region47: #{tpu_custom_call.1} parent=5 // pred_region
        // Predicated region
        $region49: #{tpu_custom_call.1} parent=47 // pred_check
          %p358 = pneg %p45
        $region50: #{tpu_custom_call.1} parent=47 // pred_check_branch
          %360 = sbr.rel (%p358) target = $region52
        $region51: #{tpu_custom_call.1} parent=47 // pred_region
          %s361 = sand.u32 %s35, 1
          %s362 = scalar_lea.sflag [#allocation3], %s361
          %s363 = sand.u32 %s35, 1
          %s364 = smul.addr %s363, 16
          %s365 = scalar_lea.vmem [#allocation2], %s364
          %s366 = smul.u32 2, %s25
          %s368 = ssub.s32 256, 256
          %369 = vsyncadd %s362, %s368
          %s370 = smul.addr %s366, 128
          %s371 = scalar_lea.hbm %s0, %s370
          %s372 = sshll.u32 %s365, 4
          %s373 = int_to_ptr.vmem [resolvable:$true] %s372
          %378 = dma.hbm_to_vmem [thread:$0]  %s371, 256, %s373, %s362, 128, 128, 8
        $region52: #{tpu_custom_call.1} parent=47 // pred_fallthru
          _
      $region48: #{tpu_custom_call.1} parent=5 // pred_fallthru
        _
      %p379 = scmp.le.s32.totalorder 1, %s25
      %p380 = scmp.lt.s32.totalorder %s25, 4
      %p381 = pnand %p379, %p380
      %p382 = pneg %p381
      // Predicated region
      $region53: #{tpu_custom_call.1} parent=5 // pred_check
        _
      $region54: #{tpu_custom_call.1} parent=5 // pred_check_branch
        %384 = sbr.rel (%p381) target = $region56
      $region55: #{tpu_custom_call.1} parent=5 // pred_region
        %s385 = ssub.s32 %s25, 1
        %s386 = sand.u32 %s38, 1
        %s387 = scalar_lea.sflag [#allocation3], %s386
        %s388 = sand.u32 %s38, 1
        %s389 = smul.addr %s388, 16
        %s390 = scalar_lea.vmem [#allocation2], %s389
        // Predicated region
        $region57: #{tpu_custom_call.1} parent=55 // pred_check
          %p391 = pneg %p51
        $region58: #{tpu_custom_call.1} parent=55 // pred_check_branch
          %393 = sbr.rel (%p391) target = $region60
        $region59: #{tpu_custom_call.1} parent=55 // pred_region
          %394 = dma.done %s387, 256
        $region60: #{tpu_custom_call.1} parent=55 // pred_fallthru
          _
        // Predicated region
        $region61: #{tpu_custom_call.1} parent=55 // pred_check
          %p395 = pneg %p72
        $region62: #{tpu_custom_call.1} parent=55 // pred_check_branch
          %397 = sbr.rel (%p395) target = $region64
        $region63: #{tpu_custom_call.1} parent=55 // pred_region
          %398 = dma.done [#allocation6], 2048
        $region64: #{tpu_custom_call.1} parent=55 // pred_fallthru
          _
        // Predicated region
        $region65: #{tpu_custom_call.1} parent=55 // pred_check
          %p399 = pneg %p93
        $region66: #{tpu_custom_call.1} parent=55 // pred_check_branch
          %401 = sbr.rel (%p399) target = $region68
        $region67: #{tpu_custom_call.1} parent=55 // pred_region
          %402 = dma.done [#allocation6], 16
        $region68: #{tpu_custom_call.1} parent=55 // pred_fallthru
          _
        // Predicated region
        $region69: #{tpu_custom_call.1} parent=55 // pred_check
          %p403 = pneg %p114
        $region70: #{tpu_custom_call.1} parent=55 // pred_check_branch
          %405 = sbr.rel (%p403) target = $region72
        $region71: #{tpu_custom_call.1} parent=55 // pred_region
          %406 = dma.done [#allocation9], 2048
        $region72: #{tpu_custom_call.1} parent=55 // pred_fallthru
          _
        // Predicated region
        $region73: #{tpu_custom_call.1} parent=55 // pred_check
          %p407 = pneg %p135
        $region74: #{tpu_custom_call.1} parent=55 // pred_check_branch
          %409 = sbr.rel (%p407) target = $region76
        $region75: #{tpu_custom_call.1} parent=55 // pred_region
          %410 = dma.done [#allocation9], 16
        $region76: #{tpu_custom_call.1} parent=55 // pred_fallthru
          _
        // Predicated region
        $region77: #{tpu_custom_call.1} parent=55 // pred_check
          %p411 = pneg %p156
        $region78: #{tpu_custom_call.1} parent=55 // pred_check_branch
          %413 = sbr.rel (%p411) target = $region80
        $region79: #{tpu_custom_call.1} parent=55 // pred_region
          %414 = dma.done [#allocation12], 2048
        $region80: #{tpu_custom_call.1} parent=55 // pred_fallthru
          _
        // Predicated region
        $region81: #{tpu_custom_call.1} parent=55 // pred_check
          %p415 = pneg %p177
        $region82: #{tpu_custom_call.1} parent=55 // pred_check_branch
          %417 = sbr.rel (%p415) target = $region84
        $region83: #{tpu_custom_call.1} parent=55 // pred_region
          %418 = dma.done [#allocation12], 16
        $region84: #{tpu_custom_call.1} parent=55 // pred_fallthru
          _
        // Predicated region
        $region85: #{tpu_custom_call.1} parent=55 // pred_check
          %p419 = pneg %p198
        $region86: #{tpu_custom_call.1} parent=55 // pred_check_branch
          %421 = sbr.rel (%p419) target = $region88
        $region87: #{tpu_custom_call.1} parent=55 // pred_region
          %422 = dma.done [#allocation15], 16
        $region88: #{tpu_custom_call.1} parent=55 // pred_fallthru
          _
        // Predicated region
        $region89: #{tpu_custom_call.1} parent=55 // pred_check
          %p423 = pneg %p219
        $region90: #{tpu_custom_call.1} parent=55 // pred_check_branch
          %425 = sbr.rel (%p423) target = $region92
        $region91: #{tpu_custom_call.1} parent=55 // pred_region
          %426 = dma.done [#allocation15], 16
        $region92: #{tpu_custom_call.1} parent=55 // pred_fallthru
          _
        %s427 = sand.u32 %s38, 1
        %s428 = scalar_lea.sflag [#allocation3], %s427
        %s429 = sand.u32 %s38, 1
        %s430 = smul.addr %s429, 16
        %s431 = scalar_lea.vmem [#allocation2], %s430
        %p432 = pneg %p51
        %p433 = pneg %p48
        %p434 = pneg %p72
        %p435 = pneg %p69
        %p436 = pneg %p93
        %p437 = pneg %p90
        %p438 = pneg %p114
        %p439 = pneg %p111
        %p440 = pneg %p135
        %p441 = pneg %p132
        %p442 = pneg %p156
        %p443 = pneg %p153
        %p444 = pneg %p177
        %p445 = pneg %p174
        %p446 = pneg %p198
        %p447 = pneg %p195
        %p448 = pneg %p219
        %p449 = pneg %p216
        %p450 = pneg %p245
        %p451 = pneg %p242
        %s452 = sand.u32 %s232, 1
        %s453 = scalar_lea.sflag [#allocation4], %s452
        %s454 = sand.u32 %s232, 1
        %s455 = smul.addr %s454, 16
        %s456 = scalar_lea.vmem [#allocation17], %s455
        %s457 = smul.u32 2, %s30
        %s458 = smul.u32 2, %s30
        %v459 = vld [vmem:[%s390] sm:$0xff]
        %v460 = vld [vmem:[%s390 + $0x8] sm:$0xff]
        %v461 = vld [vmem:[#allocation5] sm:$0xff]
        %v462 = vld [vmem:[#allocation5 + $0x8] sm:$0xff]
        %v463 = vld [vmem:[#allocation5 + $0x10] sm:$0xff]
        %v464 = vld [vmem:[#allocation5 + $0x18] sm:$0xff]
        %v465 = vld [vmem:[#allocation5 + $0x20] sm:$0xff]
        %v466 = vld [vmem:[#allocation5 + $0x28] sm:$0xff]
        %v467 = vld [vmem:[#allocation5 + $0x30] sm:$0xff]
        %v468 = vld [vmem:[#allocation5 + $0x38] sm:$0xff]
        %v469 = vld [vmem:[#allocation5 + $0x40] sm:$0xff]
        %v470 = vld [vmem:[#allocation5 + $0x48] sm:$0xff]
        %v471 = vld [vmem:[#allocation5 + $0x50] sm:$0xff]
        %v472 = vld [vmem:[#allocation5 + $0x58] sm:$0xff]
        %v473 = vld [vmem:[#allocation5 + $0x60] sm:$0xff]
        %v474 = vld [vmem:[#allocation5 + $0x68] sm:$0xff]
        %v475 = vld [vmem:[#allocation5 + $0x70] sm:$0xff]
        %v476 = vld [vmem:[#allocation5 + $0x78] sm:$0xff]
        %v477 = vld [vmem:[#allocation7] sm:$0x1]
        %v479 = vlaneseq
        %v480 = vshrl.u32 %v479, 7
        %v481 = vsub.s32 0, %v480
        %v482 = vrot.slane %v477, %v481
        %484 = vmatprep.subr.mxu0 0.0
        %485 = vmatpush1.msra.mxu0 %v461
        %486 = vmatprep.subr.mxu0 0.0
        %487 = vmatpush1.msra.mxu0 %v462
        %488 = vmatprep.subr.mxu0 0.0
        %489 = vmatpush1.msra.mxu0 %v463
        %490 = vmatprep.subr.mxu0 0.0
        %491 = vmatpush1.msra.mxu0 %v464
        %492 = vmatprep.subr.mxu0 0.0
        %493 = vmatpush1.msra.mxu0 %v465
        %494 = vmatprep.subr.mxu0 0.0
        %495 = vmatpush1.msra.mxu0 %v466
        %496 = vmatprep.subr.mxu0 0.0
        %497 = vmatpush1.msra.mxu0 %v467
        %498 = vmatprep.subr.mxu0 0.0
        %499 = vmatpush1.msra.mxu0 %v468
        %500 = vmatprep.subr.mxu0 0.0
        %501 = vmatpush1.msra.mxu0 %v469
        %502 = vmatprep.subr.mxu0 0.0
        %503 = vmatpush1.msra.mxu0 %v470
        %504 = vmatprep.subr.mxu0 0.0
        %505 = vmatpush1.msra.mxu0 %v471
        %506 = vmatprep.subr.mxu0 0.0
        %507 = vmatpush1.msra.mxu0 %v472
        %508 = vmatprep.subr.mxu0 0.0
        %509 = vmatpush1.msra.mxu0 %v473
        %510 = vmatprep.subr.mxu0 0.0
        %511 = vmatpush1.msra.mxu0 %v474
        %512 = vmatprep.subr.mxu0 0.0
        %513 = vmatpush1.msra.mxu0 %v475
        %514 = vmatprep.subr.mxu0 0.0
        %515 = vmatpush1.msra.mxu0 %v476
        %516 = vmatprep.subr.mxu0 0.0
        %517 = vmatpush1.msra.mxu0 0.0
        %518 = vmatprep.subr.mxu0 0.0
        %519 = vmatpush1.msra.mxu0 0.0
        %520 = vmatprep.subr.mxu0 0.0
        %521 = vmatpush1.msra.mxu0 0.0
        %522 = vmatprep.subr.mxu0 0.0
        %523 = vmatpush1.msra.mxu0 0.0
        %524 = vmatprep.subr.mxu0 0.0
        %525 = vmatpush1.msra.mxu0 0.0
        %526 = vmatprep.subr.mxu0 0.0
        %527 = vmatpush1.msra.mxu0 0.0
        %528 = vmatprep.subr.mxu0 0.0
        %529 = vmatpush1.msra.mxu0 0.0
        %530 = vmatprep.subr.mxu0 0.0
        %531 = vmatpush1.msra.mxu0 0.0
        %532 = vmatprep.subr.mxu0 0.0
        %533 = vmatpush1.msra.mxu0 0.0
        %534 = vmatprep.subr.mxu0 0.0
        %535 = vmatpush1.msra.mxu0 0.0
        %536 = vmatprep.subr.mxu0 0.0
        %537 = vmatpush1.msra.mxu0 0.0
        %538 = vmatprep.subr.mxu0 0.0
        %539 = vmatpush1.msra.mxu0 0.0
        %540 = vmatprep.subr.mxu0 0.0
        %541 = vmatpush1.msra.mxu0 0.0
        %542 = vmatprep.subr.mxu0 0.0
        %543 = vmatpush1.msra.mxu0 0.0
        %544 = vmatprep.subr.mxu0 0.0
        %545 = vmatpush1.msra.mxu0 0.0
        %546 = vmatprep.subr.mxu0 0.0
        %547 = vmatpush1.msra.mxu0 0.0
        %548 = vmatprep.mubr.f32.mxu0 0.0
        %549 = vmatmul.mubr.f32.gmra.mrb[0].mxu0 %v459
        %v550 = vpop.f32.mrb[0].mxu0
        %v551 = vadd.f32 %v482, %v550
        %v552 = vpop.f32.mrb[0].mxu0
        %553 = vmatprep.mubr.f32.mxu0 0.0
        %554 = vmatmul.mubr.f32.gmra.mrb[0].mxu0 %v460
        %v555 = vpop.f32.mrb[0].mxu0
        %v556 = vadd.f32 %v482, %v555
        %v557 = vpop.f32.mrb[0].mxu0
        %558 = vdwg.mxu0
        %v559 = vmul.f32 %v551, 0.5
        %v560 = vmul.f32 %v556, 0.5
        %v561 = vmul.f32 %v551, 0.70710677
        %v562 = vmul.f32 %v556, 0.70710677
        %v563 = verf.f32.pop %v561
        %v564 = verf.f32.pop %v562
        %v565 = vadd.f32 %v563, 1.0
        %v566 = vadd.f32 %v564, 1.0
        %v567 = vmul.f32 %v559, %v565
        %v568 = vmul.f32 %v560, %v566
        %v569 = vld [vmem:[#allocation8] sm:$0xff]
        %v570 = vld [vmem:[#allocation8 + $0x8] sm:$0xff]
        %v571 = vld [vmem:[#allocation8 + $0x10] sm:$0xff]
        %v572 = vld [vmem:[#allocation8 + $0x18] sm:$0xff]
        %v573 = vld [vmem:[#allocation8 + $0x20] sm:$0xff]
        %v574 = vld [vmem:[#allocation8 + $0x28] sm:$0xff]
        %v575 = vld [vmem:[#allocation8 + $0x30] sm:$0xff]
        %v576 = vld [vmem:[#allocation8 + $0x38] sm:$0xff]
        %v577 = vld [vmem:[#allocation8 + $0x40] sm:$0xff]
        %v578 = vld [vmem:[#allocation8 + $0x48] sm:$0xff]
        %v579 = vld [vmem:[#allocation8 + $0x50] sm:$0xff]
        %v580 = vld [vmem:[#allocation8 + $0x58] sm:$0xff]
        %v581 = vld [vmem:[#allocation8 + $0x60] sm:$0xff]
        %v582 = vld [vmem:[#allocation8 + $0x68] sm:$0xff]
        %v583 = vld [vmem:[#allocation8 + $0x70] sm:$0xff]
        %v584 = vld [vmem:[#allocation8 + $0x78] sm:$0xff]
        %v585 = vld [vmem:[#allocation10] sm:$0x1]
        %v587 = vlaneseq
        %v588 = vshrl.u32 %v587, 7
        %v589 = vsub.s32 0, %v588
        %v590 = vrot.slane %v585, %v589
        %592 = vmatprep.subr.mxu0 0.0
        %593 = vmatpush1.msra.mxu0 %v569
        %594 = vmatprep.subr.mxu0 0.0
        %595 = vmatpush1.msra.mxu0 %v570
        %596 = vmatprep.subr.mxu0 0.0
        %597 = vmatpush1.msra.mxu0 %v571
        %598 = vmatprep.subr.mxu0 0.0
        %599 = vmatpush1.msra.mxu0 %v572
        %600 = vmatprep.subr.mxu0 0.0
        %601 = vmatpush1.msra.mxu0 %v573
        %602 = vmatprep.subr.mxu0 0.0
        %603 = vmatpush1.msra.mxu0 %v574
        %604 = vmatprep.subr.mxu0 0.0
        %605 = vmatpush1.msra.mxu0 %v575
        %606 = vmatprep.subr.mxu0 0.0
        %607 = vmatpush1.msra.mxu0 %v576
        %608 = vmatprep.subr.mxu0 0.0
        %609 = vmatpush1.msra.mxu0 %v577
        %610 = vmatprep.subr.mxu0 0.0
        %611 = vmatpush1.msra.mxu0 %v578
        %612 = vmatprep.subr.mxu0 0.0
        %613 = vmatpush1.msra.mxu0 %v579
        %614 = vmatprep.subr.mxu0 0.0
        %615 = vmatpush1.msra.mxu0 %v580
        %616 = vmatprep.subr.mxu0 0.0
        %617 = vmatpush1.msra.mxu0 %v581
        %618 = vmatprep.subr.mxu0 0.0
        %619 = vmatpush1.msra.mxu0 %v582
        %620 = vmatprep.subr.mxu0 0.0
        %621 = vmatpush1.msra.mxu0 %v583
        %622 = vmatprep.subr.mxu0 0.0
        %623 = vmatpush1.msra.mxu0 %v584
        %624 = vmatprep.subr.mxu0 0.0
        %625 = vmatpush1.msra.mxu0 0.0
        %626 = vmatprep.subr.mxu0 0.0
        %627 = vmatpush1.msra.mxu0 0.0
        %628 = vmatprep.subr.mxu0 0.0
        %629 = vmatpush1.msra.mxu0 0.0
        %630 = vmatprep.subr.mxu0 0.0
        %631 = vmatpush1.msra.mxu0 0.0
        %632 = vmatprep.subr.mxu0 0.0
        %633 = vmatpush1.msra.mxu0 0.0
        %634 = vmatprep.subr.mxu0 0.0
        %635 = vmatpush1.msra.mxu0 0.0
        %636 = vmatprep.subr.mxu0 0.0
        %637 = vmatpush1.msra.mxu0 0.0
        %638 = vmatprep.subr.mxu0 0.0
        %639 = vmatpush1.msra.mxu0 0.0
        %640 = vmatprep.subr.mxu0 0.0
        %641 = vmatpush1.msra.mxu0 0.0
        %642 = vmatprep.subr.mxu0 0.0
        %643 = vmatpush1.msra.mxu0 0.0
        %644 = vmatprep.subr.mxu0 0.0
        %645 = vmatpush1.msra.mxu0 0.0
        %646 = vmatprep.subr.mxu0 0.0
        %647 = vmatpush1.msra.mxu0 0.0
        %648 = vmatprep.subr.mxu0 0.0
        %649 = vmatpush1.msra.mxu0 0.0
        %650 = vmatprep.subr.mxu0 0.0
        %651 = vmatpush1.msra.mxu0 0.0
        %652 = vmatprep.subr.mxu0 0.0
        %653 = vmatpush1.msra.mxu0 0.0
        %654 = vmatprep.subr.mxu0 0.0
        %655 = vmatpush1.msra.mxu0 0.0
        %656 = vmatprep.mubr.f32.mxu0 0.0
        %657 = vmatmul.mubr.f32.gmra.mrb[0].mxu0 %v567
        %v658 = vpop.f32.mrb[0].mxu0
        %v659 = vadd.f32 %v590, %v658
        %v660 = vpop.f32.mrb[0].mxu0
        %661 = vmatprep.mubr.f32.mxu0 0.0
        %662 = vmatmul.mubr.f32.gmra.mrb[0].mxu0 %v568
        %v663 = vpop.f32.mrb[0].mxu0
        %v664 = vadd.f32 %v590, %v663
        %v665 = vpop.f32.mrb[0].mxu0
        %666 = vdwg.mxu0
        %v667 = vmul.f32 %v659, 0.5
        %v668 = vmul.f32 %v664, 0.5
        %v669 = vmul.f32 %v659, 0.70710677
        %v670 = vmul.f32 %v664, 0.70710677
        %v671 = verf.f32.pop %v669
        %v672 = verf.f32.pop %v670
        %v673 = vadd.f32 %v671, 1.0
        %v674 = vadd.f32 %v672, 1.0
        %v675 = vmul.f32 %v667, %v673
        %v676 = vmul.f32 %v668, %v674
        %v677 = vld [vmem:[#allocation11] sm:$0xff]
        %v678 = vld [vmem:[#allocation11 + $0x8] sm:$0xff]
        %v679 = vld [vmem:[#allocation11 + $0x10] sm:$0xff]
        %v680 = vld [vmem:[#allocation11 + $0x18] sm:$0xff]
        %v681 = vld [vmem:[#allocation11 + $0x20] sm:$0xff]
        %v682 = vld [vmem:[#allocation11 + $0x28] sm:$0xff]
        %v683 = vld [vmem:[#allocation11 + $0x30] sm:$0xff]
        %v684 = vld [vmem:[#allocation11 + $0x38] sm:$0xff]
        %v685 = vld [vmem:[#allocation11 + $0x40] sm:$0xff]
        %v686 = vld [vmem:[#allocation11 + $0x48] sm:$0xff]
        %v687 = vld [vmem:[#allocation11 + $0x50] sm:$0xff]
        %v688 = vld [vmem:[#allocation11 + $0x58] sm:$0xff]
        %v689 = vld [vmem:[#allocation11 + $0x60] sm:$0xff]
        %v690 = vld [vmem:[#allocation11 + $0x68] sm:$0xff]
        %v691 = vld [vmem:[#allocation11 + $0x70] sm:$0xff]
        %v692 = vld [vmem:[#allocation11 + $0x78] sm:$0xff]
        %v693 = vld [vmem:[#allocation13] sm:$0x1]
        %v695 = vlaneseq
        %v696 = vshrl.u32 %v695, 7
        %v697 = vsub.s32 0, %v696
        %v698 = vrot.slane %v693, %v697
        %700 = vmatprep.subr.mxu0 0.0
        %701 = vmatpush1.msra.mxu0 %v677
        %702 = vmatprep.subr.mxu0 0.0
        %703 = vmatpush1.msra.mxu0 %v678
        %704 = vmatprep.subr.mxu0 0.0
        %705 = vmatpush1.msra.mxu0 %v679
        %706 = vmatprep.subr.mxu0 0.0
        %707 = vmatpush1.msra.mxu0 %v680
        %708 = vmatprep.subr.mxu0 0.0
        %709 = vmatpush1.msra.mxu0 %v681
        %710 = vmatprep.subr.mxu0 0.0
        %711 = vmatpush1.msra.mxu0 %v682
        %712 = vmatprep.subr.mxu0 0.0
        %713 = vmatpush1.msra.mxu0 %v683
        %714 = vmatprep.subr.mxu0 0.0
        %715 = vmatpush1.msra.mxu0 %v684
        %716 = vmatprep.subr.mxu0 0.0
        %717 = vmatpush1.msra.mxu0 %v685
        %718 = vmatprep.subr.mxu0 0.0
        %719 = vmatpush1.msra.mxu0 %v686
        %720 = vmatprep.subr.mxu0 0.0
        %721 = vmatpush1.msra.mxu0 %v687
        %722 = vmatprep.subr.mxu0 0.0
        %723 = vmatpush1.msra.mxu0 %v688
        %724 = vmatprep.subr.mxu0 0.0
        %725 = vmatpush1.msra.mxu0 %v689
        %726 = vmatprep.subr.mxu0 0.0
        %727 = vmatpush1.msra.mxu0 %v690
        %728 = vmatprep.subr.mxu0 0.0
        %729 = vmatpush1.msra.mxu0 %v691
        %730 = vmatprep.subr.mxu0 0.0
        %731 = vmatpush1.msra.mxu0 %v692
        %732 = vmatprep.subr.mxu0 0.0
        %733 = vmatpush1.msra.mxu0 0.0
        %734 = vmatprep.subr.mxu0 0.0
        %735 = vmatpush1.msra.mxu0 0.0
        %736 = vmatprep.subr.mxu0 0.0
        %737 = vmatpush1.msra.mxu0 0.0
        %738 = vmatprep.subr.mxu0 0.0
        %739 = vmatpush1.msra.mxu0 0.0
        %740 = vmatprep.subr.mxu0 0.0
        %741 = vmatpush1.msra.mxu0 0.0
        %742 = vmatprep.subr.mxu0 0.0
        %743 = vmatpush1.msra.mxu0 0.0
        %744 = vmatprep.subr.mxu0 0.0
        %745 = vmatpush1.msra.mxu0 0.0
        %746 = vmatprep.subr.mxu0 0.0
        %747 = vmatpush1.msra.mxu0 0.0
        %748 = vmatprep.subr.mxu0 0.0
        %749 = vmatpush1.msra.mxu0 0.0
        %750 = vmatprep.subr.mxu0 0.0
        %751 = vmatpush1.msra.mxu0 0.0
        %752 = vmatprep.subr.mxu0 0.0
        %753 = vmatpush1.msra.mxu0 0.0
        %754 = vmatprep.subr.mxu0 0.0
        %755 = vmatpush1.msra.mxu0 0.0
        %756 = vmatprep.subr.mxu0 0.0
        %757 = vmatpush1.msra.mxu0 0.0
        %758 = vmatprep.subr.mxu0 0.0
        %759 = vmatpush1.msra.mxu0 0.0
        %760 = vmatprep.subr.mxu0 0.0
        %761 = vmatpush1.msra.mxu0 0.0
        %762 = vmatprep.subr.mxu0 0.0
        %763 = vmatpush1.msra.mxu0 0.0
        %764 = vmatprep.mubr.f32.mxu0 0.0
        %765 = vmatmul.mubr.f32.gmra.mrb[0].mxu0 %v675
        %v766 = vpop.f32.mrb[0].mxu0
        %v767 = vadd.f32 %v698, %v766
        %v768 = vpop.f32.mrb[0].mxu0
        %769 = vmatprep.mubr.f32.mxu0 0.0
        %770 = vmatmul.mubr.f32.gmra.mrb[0].mxu0 %v676
        %v771 = vpop.f32.mrb[0].mxu0
        %v772 = vadd.f32 %v698, %v771
        %v773 = vpop.f32.mrb[0].mxu0
        %774 = vdwg.mxu0
        %v775 = vadd.f32 %v767, %v459
        %v776 = vadd.f32 %v772, %v460
        %777 = vadd.xlane.f32.xlu0 %v775
        %v778 = vpop.xlane.xlu0 %777
        %779 = vadd.xlane.f32.xlu0 %v776
        %v780 = vpop.xlane.xlu0 %779
        %v781 = vmul.f32 %v778, 0.03125
        %v782 = vmul.f32 %v780, 0.03125
        %v783 = vlaneseq
        %v784 = vand.u32 %v783, 127
        %vm785 = vcmp.lt.s32.totalorder %v784, 32
        %v786 = vsub.f32 %v775, %v781
        %v787 = vsub.f32 %v776, %v782
        %v788 = vsel %vm785, %v786, 0.0
        %v789 = vsel %vm785, %v787, 0.0
        %v790 = vmul.f32 %v788, %v788
        %v791 = vmul.f32 %v789, %v789
        %792 = vadd.xlane.f32.xlu0 %v790
        %v793 = vpop.xlane.xlu0 %792
        %794 = vadd.xlane.f32.xlu0 %v791
        %v795 = vpop.xlane.xlu0 %794
        %v796 = vmul.f32 %v793, 0.03125
        %v797 = vmul.f32 %v795, 0.03125
        %v798 = vadd.f32 %v796, 1e-05
        %v799 = vadd.f32 %v797, 1e-05
        %v800 = vrsqrt.pop %v798
        %v801 = vrsqrt.pop %v799
        %v802 = vmul.f32 %v788, %v800
        %v803 = vmul.f32 %v789, %v801
        %v804 = vld [vmem:[#allocation14] sm:$0x1]
        %v806 = vlaneseq
        %v807 = vshrl.u32 %v806, 7
        %v808 = vsub.s32 0, %v807
        %v809 = vrot.slane %v804, %v808
        %v811 = vmul.f32 %v802, %v809
        %v812 = vmul.f32 %v803, %v809
        %v813 = vld [vmem:[#allocation16] sm:$0x1]
        %v815 = vlaneseq
        %v816 = vshrl.u32 %v815, 7
        %v817 = vsub.s32 0, %v816
        %v818 = vrot.slane %v813, %v817
        %v820 = vadd.f32 %v811, %v818
        %v821 = vadd.f32 %v812, %v818
        %822 = vst [vmem:[%s456] sm:$0xff] %v820
        %823 = vst [vmem:[%s456 + $0x8] sm:$0xff] %v821
        %s824 = sand.u32 %s232, 1
        %s825 = scalar_lea.sflag [#allocation4], %s824
        %s826 = sand.u32 %s232, 1
        %s827 = smul.addr %s826, 16
        %s828 = scalar_lea.vmem [#allocation17], %s827
        // Predicated region
        $region93: #{tpu_custom_call.1} parent=55 // pred_check
          %p829 = pneg %p242
        $region94: #{tpu_custom_call.1} parent=55 // pred_check_branch
          %831 = sbr.rel (%p829) target = $region96
        $region95: #{tpu_custom_call.1} parent=55 // pred_region
          %s832 = smul.u32 2, %s30
          %s834 = ssub.s32 256, 256
          %835 = vsyncadd %s825, %s834
          %s836 = smul.addr %s832, 128
          %s837 = scalar_lea.hbm %s9, %s836
          %s838 = sshll.u32 %s828, 4
          %s839 = int_to_ptr.vmem [resolvable:$true] %s838
          %844 = dma.vmem_to_hbm [thread:$0]  %s839, 256, %s837, %s825, 128, 128, 8
        $region96: #{tpu_custom_call.1} parent=55 // pred_fallthru
          _
      $region56: #{tpu_custom_call.1} parent=5 // pred_fallthru
        _
      %p845 = scmp.le.s32.totalorder 2, %s25
      // Predicated region
      $region97: #{tpu_custom_call.1} parent=5 // pred_check
        %p846 = pneg %p845
      $region98: #{tpu_custom_call.1} parent=5 // pred_check_branch
        %848 = sbr.rel (%p846) target = $region100
      $region99: #{tpu_custom_call.1} parent=5 // pred_region
        %s849 = ssub.s32 %s25, 2
        // Predicated region
        $region101: #{tpu_custom_call.1} parent=99 // pred_check
          %p850 = pneg %p248
        $region102: #{tpu_custom_call.1} parent=99 // pred_check_branch
          %852 = sbr.rel (%p850) target = $region104
        $region103: #{tpu_custom_call.1} parent=99 // pred_region
          %s853 = sand.u32 %s233, 1
          %s854 = scalar_lea.sflag [#allocation4], %s853
          %s855 = sand.u32 %s233, 1
          %s856 = smul.addr %s855, 16
          %s857 = scalar_lea.vmem [#allocation17], %s856
          %858 = dma.done %s854, 256
        $region104: #{tpu_custom_call.1} parent=99 // pred_fallthru
          _
      $region100: #{tpu_custom_call.1} parent=5 // pred_fallthru
        _
    $region6: #{tpu_custom_call.1} parent=1 // loop_footer
      %s29 = sadd.s32 1, %s25
    $region7: #{tpu_custom_call.1} parent=1 // loop_footer_branch
      %24 = sbr.rel target = $region3
    $region8: #{tpu_custom_call.1} parent=1 // loop_exit
      _
    %859 = vsyncpa [#allocation3], 1
    %s860 = scalar_lea.sflag [#allocation3], 1
    %861 = vsyncpa %s860, 1
    %862 = vsyncpa [#allocation6], 1
    %863 = vsyncpa [#allocation9], 1
    %864 = vsyncpa [#allocation12], 1
    %865 = vsyncpa [#allocation15], 1
    %866 = vsyncpa [#allocation4], 1
    %s867 = scalar_lea.sflag [#allocation4], 1
    %868 = vsyncpa %s867, 1

</llo_original>
